<compile_context>
chip_gen: v6e
topology: v6e:2x2x1
jax: 0.10.0
libtpu: 0.0.40
codegen_flags: <defaults>
</compile_context>

<pallas_src>
import functools

import jax
import jax.numpy as jnp
from jax.experimental import pallas as pl
from jax.experimental.pallas import tpu as pltpu

LN_EPS = 1e-5  # nn.LayerNorm default eps

PARAM_KEYS = ("ln1_g", "ln1_b", "wqkv", "wout", "bout",
              "ln2_g", "ln2_b", "w1", "b1", "w2", "b2")


def _layernorm(x, gamma, beta):
    # x: (M, D) f32, gamma/beta: (1, D) f32
    mean = jnp.mean(x, axis=-1, keepdims=True)
    var = jnp.mean((x - mean) * (x - mean), axis=-1, keepdims=True)
    return (x - mean) * jax.lax.rsqrt(var + LN_EPS) * gamma + beta


def transformer_layer_kernel(x_ref, ln1g_ref, ln1b_ref, wqkv_ref, wout_ref,
                             bout_ref, ln2g_ref, ln2b_ref, w1_ref, b1_ref,
                             w2_ref, b2_ref, o_ref, resid_ref,
                             *, heads, approx_recip):
    layer = pl.program_id(1)
    TB, N, D = x_ref.shape
    M = TB * N
    dh = D // heads
    cdt = wqkv_ref.dtype                     # MXU input dtype (f32 or bf16)

    # Layer 0: seed the f32 resident residual stream from the input block.
    @pl.when(layer == 0)
    def _():
        resid_ref[...] = x_ref[...].reshape(M, D).astype(jnp.float32)

    x = resid_ref[...]                        # (M, D) f32 residual stream

    # ----------------- PreNorm + Attention + residual -----------------
    ln1 = _layernorm(x, ln1g_ref[0], ln1b_ref[0])                     # (M, D)
    # Fused lane-dense QKV projection: one (M, D) @ (D, 3D) matmul.
    # The softmax scale is already baked into the Q columns (pack_params).
    qkv = jnp.dot(ln1.astype(cdt), wqkv_ref[0],
                  preferred_element_type=cdt)                         # (M, 3D)

    ctx_parts = []
    for h in range(heads):                    # small static head loop
        qh = qkv[:, h * dh:(h + 1) * dh].reshape(TB, N, dh)
        kh = qkv[:, D + h * dh:D + (h + 1) * dh].reshape(TB, N, dh)
        vh = qkv[:, 2 * D + h * dh:2 * D + (h + 1) * dh].reshape(TB, N, dh)
        s = jnp.einsum("bnd,bmd->bnm", qh, kh,
                       preferred_element_type=jnp.float32)            # (TB, N, N)
        s = s - jnp.max(s, axis=-1, keepdims=True)
        e = jnp.exp(s)
        p = e * pl.reciprocal(jnp.sum(e, axis=-1, keepdims=True),
                              approx=approx_recip)
        c = jnp.einsum("bnm,bmd->bnd", p.astype(cdt), vh,
                       preferred_element_type=cdt)                    # (TB, N, dh)
        ctx_parts.append(c.reshape(M, dh))

    # Head concat along lanes (matches 'b h n d -> b n (h d)'), then ONE
    # lane-dense output projection; the MXU accumulator does the head sum.
    ctx = jnp.concatenate(ctx_parts, axis=-1)                         # (M, D)
    y = jnp.dot(ctx, wout_ref[0],
                preferred_element_type=jnp.float32) + bout_ref[0]
    x = x + y                                                         # residual (f32)

    # ----------------- PreNorm + FeedForward + residual -----------------
    ln2 = _layernorm(x, ln2g_ref[0], ln2b_ref[0])
    h1 = jnp.dot(ln2.astype(cdt), w1_ref[0],
                 preferred_element_type=jnp.float32) + b1_ref[0]
    h1 = jnp.maximum(h1, 0.0)                                         # ReLU
    y2 = jnp.dot(h1.astype(cdt), w2_ref[0],
                 preferred_element_type=jnp.float32) + b2_ref[0]
    x = x + y2

    resid_ref[...] = x

    # Write the output block exactly once, after the last layer.
    @pl.when(layer == pl.num_programs(1) - 1)
    def _():
        o_ref[...] = x.reshape(TB, N, D).astype(o_ref.dtype)


def transformer_forward(x, packed, *, heads, batch_block=None,
                        approx_recip=False, vmem_limit_bytes=48 * 1024 * 1024):
    """x: (B, N, D) f32; packed: stacked per-layer params (see pack_params)."""
    B, N, D = x.shape
    depth = packed["wqkv"].shape[0]
    assert D % heads == 0, "dim must be divisible by heads"

    if batch_block is None:
        # Largest divisor of B that keeps M = TB*N near the MXU sweet spot.
        # (On v7x prefer B // batch_block >= 2 so both TensorCores get work.)
        target = max(1, 128 // max(N, 1))
        batch_block = 1
        for tb in range(1, min(B, target) + 1):
            if B % tb == 0:
                batch_block = tb
    assert B % batch_block == 0, "batch_block must divide batch"
    TB = batch_block

    def layer_spec(arr):
        nd = arr.ndim
        return pl.BlockSpec((1,) + arr.shape[1:],
                            lambda b, l, nd=nd: (l,) + (0,) * (nd - 1))

    kern = functools.partial(transformer_layer_kernel, heads=heads,
                             approx_recip=approx_recip)

    return pl.pallas_call(
        kern,
        out_shape=jax.ShapeDtypeStruct((B, N, D), x.dtype),
        grid=(B // TB, depth),
        in_specs=[pl.BlockSpec((TB, N, D), lambda b, l: (b, 0, 0))]
                 + [layer_spec(packed[k]) for k in PARAM_KEYS],
        out_specs=pl.BlockSpec((TB, N, D), lambda b, l: (b, 0, 0)),
        scratch_shapes=[pltpu.VMEM((TB * N, D), jnp.float32)],
        compiler_params=pltpu.CompilerParams(
            dimension_semantics=("parallel", "arbitrary"),
            vmem_limit_bytes=vmem_limit_bytes),
    )(x, *(packed[k] for k in PARAM_KEYS))


# ----------------------------------------------------------------------------
# Parameter construction / packing
# ----------------------------------------------------------------------------
def init_transformer_params(key, dim, depth, heads, mlp_dim):
    """Deterministic synthetic parameters (shapes mirror the PyTorch module;
    nn.Linear weights are stored pre-transposed as (in, out))."""
    params = []
    for _ in range(depth):
        keys = jax.random.split(key, 6)
        key = keys[0]
        params.append({
            "ln1_g": jnp.ones((1, dim), jnp.float32),
            "ln1_b": jnp.zeros((1, dim), jnp.float32),
            "wqkv": jax.random.normal(keys[1], (dim, 3 * dim), jnp.float32) * 0.02,
            "wout": jax.random.normal(keys[2], (dim, dim), jnp.float32) * 0.02,
            "bout": jnp.zeros((1, dim), jnp.float32),
            "ln2_g": jnp.ones((1, dim), jnp.float32),
            "ln2_b": jnp.zeros((1, dim), jnp.float32),
            "w1": jax.random.normal(keys[3], (dim, mlp_dim), jnp.float32) * 0.02,
            "b1": jax.random.normal(keys[4], (1, mlp_dim), jnp.float32) * 0.02,
            "w2": jax.random.normal(keys[5], (mlp_dim, dim), jnp.float32) * 0.02,
            "b2": jnp.zeros((1, dim), jnp.float32),
        })
    return params


def pack_params(params, *, compute_dtype=jnp.float32):
    """Stack per-layer params along a depth axis.  QKV stays fused and
    lane-dense (D, 3D); the module's softmax scale dim**-0.5 is baked into
    the Q columns so the kernel never scales the scores."""
    D = params[0]["wqkv"].shape[0]
    scale = float(D) ** -0.5          # module: dim ** -0.5 (NOT head_dim ** -0.5)

    def stack(k):
        return jnp.stack([p[k] for p in params])

    wqkv = []
    for p in params:
        w = p["wqkv"]                                              # (D, 3D)
        wqkv.append(jnp.concatenate([w[:, :D] * scale, w[:, D:]], axis=1))

    return {
        "ln1_g": stack("ln1_g"), "ln1_b": stack("ln1_b"),
        "wqkv": jnp.stack(wqkv).astype(compute_dtype),
        "wout": stack("wout").astype(compute_dtype),
        "bout": stack("bout"),
        "ln2_g": stack("ln2_g"), "ln2_b": stack("ln2_b"),
        "w1": stack("w1").astype(compute_dtype), "b1": stack("b1"),
        "w2": stack("w2").astype(compute_dtype), "b2": stack("b2"),
    }


# ----------------------------------------------------------------------------
# Pure-JAX reference (same math as the PyTorch module) for a sanity check.
# ----------------------------------------------------------------------------
def _ref_forward(x, params, *, heads):
    def ln(x, g, b):
        m = jnp.mean(x, axis=-1, keepdims=True)
        v = jnp.mean((x - m) ** 2, axis=-1, keepdims=True)
        return (x - m) * jax.lax.rsqrt(v + LN_EPS) * g + b

    B, N, D = x.shape
    dh = D // heads
    scale = float(D) ** -0.5
    for p in params:
        h_in = ln(x, p["ln1_g"][0], p["ln1_b"][0])
        qkv = h_in @ p["wqkv"]
        q, k, v = jnp.split(qkv, 3, axis=-1)
        q = q.reshape(B, N, heads, dh).transpose(0, 2, 1, 3)
        k = k.reshape(B, N, heads, dh).transpose(0, 2, 1, 3)
        v = v.reshape(B, N, heads, dh).transpose(0, 2, 1, 3)
        dots = jnp.einsum("bhid,bhjd->bhij", q, k) * scale
        attn = jax.nn.softmax(dots, axis=-1)
        out = jnp.einsum("bhij,bhjd->bhid", attn, v)
        out = out.transpose(0, 2, 1, 3).reshape(B, N, D)
        x = out @ p["wout"] + p["bout"][0] + x

        h_in = ln(x, p["ln2_g"][0], p["ln2_b"][0])
        hdn = jnp.maximum(h_in @ p["w1"] + p["b1"][0], 0.0)
        x = hdn @ p["w2"] + p["b2"][0] + x
    return x


if __name__ == "__main__":
    # Small shapes: batch=2, seq=8, dim=32, heads=4 (head_dim=8), mlp_dim=64, depth=2
    B, N, DIM, HEADS, MLP_DIM, DEPTH = 2, 8, 32, 4, 64, 2

    key = jax.random.PRNGKey(0)
    kx, kp = jax.random.split(key)
    x = jax.random.normal(kx, (B, N, DIM), jnp.float32)
    params = init_transformer_params(kp, DIM, DEPTH, HEADS, MLP_DIM)
    ref = _ref_forward(x, params, heads=HEADS)

    # f32 MXU path, exact reciprocal, batch block of 1 (2 parallel grid blocks)
    # -> tight check against the JAX reference.
    packed_f32 = pack_params(params, compute_dtype=jnp.float32)
    out_f32 = jax.block_until_ready(
        transformer_forward(x, packed_f32, heads=HEADS, batch_block=1,
                            approx_recip=False))
    assert out_f32.shape == (B, N, DIM)
    assert jnp.allclose(out_f32, ref, atol=1e-4, rtol=1e-4), "f32 mismatch vs reference"

    # bf16 MXU inputs (f32 accumulation) + approximate EUP reciprocal, default
    # batch blocking (whole batch folded into one M slab) -> loose check.
    packed_bf16 = pack_params(params, compute_dtype=jnp.bfloat16)
    out_bf16 = jax.block_until_ready(
        transformer_forward(x, packed_bf16, heads=HEADS, approx_recip=True))
    assert out_bf16.shape == (B, N, DIM)
    assert jnp.allclose(out_bf16, ref, atol=3e-2, rtol=3e-2), "bf16 mismatch vs reference"

    print("KERNEL_OK")
</pallas_src>

<mosaic_0001>
module attributes {stable_mosaic.version = 11 : i64} {
  func.func @transformer_layer_kernel(%arg0: i32, %arg1: i32, %arg2: memref<1x8x32xf32, #tpu.memory_space<vmem>>, %arg3: memref<1x1x32xf32, #tpu.memory_space<vmem>>, %arg4: memref<1x1x32xf32, #tpu.memory_space<vmem>>, %arg5: memref<1x32x96xf32, #tpu.memory_space<vmem>>, %arg6: memref<1x32x32xf32, #tpu.memory_space<vmem>>, %arg7: memref<1x1x32xf32, #tpu.memory_space<vmem>>, %arg8: memref<1x1x32xf32, #tpu.memory_space<vmem>>, %arg9: memref<1x1x32xf32, #tpu.memory_space<vmem>>, %arg10: memref<1x32x64xf32, #tpu.memory_space<vmem>>, %arg11: memref<1x1x64xf32, #tpu.memory_space<vmem>>, %arg12: memref<1x64x32xf32, #tpu.memory_space<vmem>>, %arg13: memref<1x1x32xf32, #tpu.memory_space<vmem>>, %arg14: memref<1x8x32xf32, #tpu.memory_space<vmem>>, %arg15: memref<8x32xf32, #tpu.memory_space<vmem>>) attributes {dimension_semantics = [#tpu.dimension_semantics<parallel>, #tpu.dimension_semantics<arbitrary>], iteration_bounds = array<i64: 2, 2>, scalar_prefetch = 0 : i64, scratch_operands = 1 : i64, tpu.core_type = #tpu.core_type<tc>, window_params = [{transform_indices = @transform_0, window_bounds = array<i64: 1, 8, 32>}, {transform_indices = @transform_1, window_bounds = array<i64: 1, 1, 32>}, {transform_indices = @transform_2, window_bounds = array<i64: 1, 1, 32>}, {transform_indices = @transform_3, window_bounds = array<i64: 1, 32, 96>}, {transform_indices = @transform_4, window_bounds = array<i64: 1, 32, 32>}, {transform_indices = @transform_5, window_bounds = array<i64: 1, 1, 32>}, {transform_indices = @transform_6, window_bounds = array<i64: 1, 1, 32>}, {transform_indices = @transform_7, window_bounds = array<i64: 1, 1, 32>}, {transform_indices = @transform_8, window_bounds = array<i64: 1, 32, 64>}, {transform_indices = @transform_9, window_bounds = array<i64: 1, 1, 64>}, {transform_indices = @transform_10, window_bounds = array<i64: 1, 64, 32>}, {transform_indices = @transform_11, window_bounds = array<i64: 1, 1, 32>}, {transform_indices = @transform_12, window_bounds = array<i64: 1, 8, 32>}]} {
    %c0_i32 = arith.constant 0 : i32
    %0 = arith.cmpi eq, %arg1, %c0_i32 : i32
    %1 = arith.extui %0 : i1 to i32
    %c0_i32_0 = arith.constant 0 : i32
    %2 = arith.cmpi ne, %1, %c0_i32_0 : i32
    scf.if %2 {
      %c0_68 = arith.constant 0 : index
      %c0_69 = arith.constant 0 : index
      %c0_70 = arith.constant 0 : index
      %169 = vector.load %arg2[%c0_68, %c0_69, %c0_70] : memref<1x8x32xf32, #tpu.memory_space<vmem>>, vector<1x8x32xf32>
      %170 = vector.shape_cast %169 : vector<1x8x32xf32> to vector<8x32xf32>
      %c0_71 = arith.constant 0 : index
      %c0_72 = arith.constant 0 : index
      %171 = vector.load %arg15[%c0_71, %c0_72] : memref<8x32xf32, #tpu.memory_space<vmem>>, vector<8x32xf32>
      tpu.vector_store %arg15[%c0_71, %c0_72], %170 {strides = array<i32>} : memref<8x32xf32, #tpu.memory_space<vmem>>, vector<8x32xf32>,
    } else {
    }
    %c0 = arith.constant 0 : index
    %c0_1 = arith.constant 0 : index
    %3 = vector.load %arg15[%c0, %c0_1] : memref<8x32xf32, #tpu.memory_space<vmem>>, vector<8x32xf32>
    %c0_2 = arith.constant 0 : index
    %c0_3 = arith.constant 0 : index
    %c0_4 = arith.constant 0 : index
    %4 = vector.load %arg3[%c0_2, %c0_3, %c0_4] : memref<1x1x32xf32, #tpu.memory_space<vmem>>, vector<1x1x32xf32>
    %5 = vector.shape_cast %4 : vector<1x1x32xf32> to vector<1x32xf32>
    %c0_5 = arith.constant 0 : index
    %c0_6 = arith.constant 0 : index
    %c0_7 = arith.constant 0 : index
    %6 = vector.load %arg4[%c0_5, %c0_6, %c0_7] : memref<1x1x32xf32, #tpu.memory_space<vmem>>, vector<1x1x32xf32>
    %7 = vector.shape_cast %6 : vector<1x1x32xf32> to vector<1x32xf32>
    %cst = arith.constant dense<0.000000e+00> : vector<8xf32>
    %8 = vector.multi_reduction <add>, %3, %cst [1] : vector<8x32xf32> to vector<8xf32>
    %9 = vector.shape_cast %8 : vector<8xf32> to vector<8x1xf32>
    %cst_8 = arith.constant 3.200000e+01 : f32
    %10 = vector.broadcast %cst_8 : f32 to vector<8x1xf32>
    %11 = arith.divf %9, %10 : vector<8x1xf32>
    %12 = vector.broadcast %11 : vector<8x1xf32> to vector<8x32xf32>
    %13 = arith.subf %3, %12 : vector<8x32xf32>
    %14 = vector.broadcast %11 : vector<8x1xf32> to vector<8x32xf32>
    %15 = arith.subf %3, %14 : vector<8x32xf32>
    %16 = arith.mulf %13, %15 : vector<8x32xf32>
    %cst_9 = arith.constant dense<0.000000e+00> : vector<8xf32>
    %17 = vector.multi_reduction <add>, %16, %cst_9 [1] : vector<8x32xf32> to vector<8xf32>
    %18 = vector.shape_cast %17 : vector<8xf32> to vector<8x1xf32>
    %cst_10 = arith.constant 3.200000e+01 : f32
    %19 = vector.broadcast %cst_10 : f32 to vector<8x1xf32>
    %20 = arith.divf %18, %19 : vector<8x1xf32>
    %21 = vector.broadcast %11 : vector<8x1xf32> to vector<8x32xf32>
    %22 = arith.subf %3, %21 : vector<8x32xf32>
    %cst_11 = arith.constant 9.99999974E-6 : f32
    %23 = vector.broadcast %cst_11 : f32 to vector<8x1xf32>
    %24 = arith.addf %20, %23 : vector<8x1xf32>
    %25 = math.rsqrt %24 : vector<8x1xf32>
    %26 = vector.broadcast %25 : vector<8x1xf32> to vector<8x32xf32>
    %27 = arith.mulf %22, %26 : vector<8x32xf32>
    %28 = vector.broadcast %5 : vector<1x32xf32> to vector<8x32xf32>
    %29 = arith.mulf %27, %28 : vector<8x32xf32>
    %30 = vector.broadcast %7 : vector<1x32xf32> to vector<8x32xf32>
    %31 = arith.addf %29, %30 : vector<8x32xf32>
    %c0_12 = arith.constant 0 : index
    %c0_13 = arith.constant 0 : index
    %c0_14 = arith.constant 0 : index
    %32 = vector.load %arg5[%c0_12, %c0_13, %c0_14] : memref<1x32x96xf32, #tpu.memory_space<vmem>>, vector<1x32x96xf32>
    %33 = vector.shape_cast %32 : vector<1x32x96xf32> to vector<32x96xf32>
    %cst_15 = arith.constant dense<0.000000e+00> : vector<8x96xf32>
    %34 = tpu.matmul %31, %33, %cst_15 {dimension_numbers = #tpu.dot_dimension_numbers<[1], [0], [0], [1], [0, 0, 1, 1], [], []>} : vector<8x32xf32>, vector<32x96xf32>, vector<8x96xf32> -> vector<8x96xf32>
    %35 = vector.extract_strided_slice %34 {offsets = [0, 0], sizes = [8, 8], strides = [1, 1]} : vector<8x96xf32> to vector<8x8xf32>
    %36 = vector.shape_cast %35 : vector<8x8xf32> to vector<1x8x8xf32>
    %37 = vector.extract_strided_slice %34 {offsets = [0, 32], sizes = [8, 8], strides = [1, 1]} : vector<8x96xf32> to vector<8x8xf32>
    %38 = vector.shape_cast %37 : vector<8x8xf32> to vector<1x8x8xf32>
    %39 = vector.extract_strided_slice %34 {offsets = [0, 64], sizes = [8, 8], strides = [1, 1]} : vector<8x96xf32> to vector<8x8xf32>
    %40 = vector.shape_cast %39 : vector<8x8xf32> to vector<1x8x8xf32>
    "tpu.trace_start"() <{level = 10 : i32, message = "bnd,bmd->bnm"}> : () -> ()
    %cst_16 = arith.constant dense<0.000000e+00> : vector<1x8x8xf32>
    %41 = tpu.matmul %36, %38, %cst_16 {dimension_numbers = #tpu.dot_dimension_numbers<[2], [2], [1], [1], [0, 0, 0, 1, 1, 1], [0], [0]>} : vector<1x8x8xf32>, vector<1x8x8xf32>, vector<1x8x8xf32> -> vector<1x8x8xf32>
    "tpu.trace_stop"() : () -> ()
    %cst_17 = arith.constant dense<0xFF800000> : vector<1x8xf32>
    %42 = vector.multi_reduction <maximumf>, %41, %cst_17 [2] : vector<1x8x8xf32> to vector<1x8xf32>
    %43 = vector.shape_cast %42 : vector<1x8xf32> to vector<1x8x1xf32>
    %44 = vector.broadcast %43 : vector<1x8x1xf32> to vector<1x8x8xf32>
    %45 = arith.subf %41, %44 : vector<1x8x8xf32>
    %46 = math.exp %45 : vector<1x8x8xf32>
    %cst_18 = arith.constant dense<0.000000e+00> : vector<1x8xf32>
    %47 = vector.multi_reduction <add>, %46, %cst_18 [2] : vector<1x8x8xf32> to vector<1x8xf32>
    %48 = vector.shape_cast %47 : vector<1x8xf32> to vector<1x8x1xf32>
    %49 = tpu.reciprocal %48 : vector<1x8x1xf32> -> vector<1x8x1xf32>
    %50 = vector.broadcast %49 : vector<1x8x1xf32> to vector<1x8x8xf32>
    %51 = arith.mulf %46, %50 : vector<1x8x8xf32>
    "tpu.trace_start"() <{level = 10 : i32, message = "bnm,bmd->bnd"}> : () -> ()
    %cst_19 = arith.constant dense<0.000000e+00> : vector<1x8x8xf32>
    %52 = tpu.matmul %51, %40, %cst_19 {dimension_numbers = #tpu.dot_dimension_numbers<[2], [1], [1], [2], [0, 0, 0, 1, 1, 2], [0], [0]>} : vector<1x8x8xf32>, vector<1x8x8xf32>, vector<1x8x8xf32> -> vector<1x8x8xf32>
    "tpu.trace_stop"() : () -> ()
    %53 = vector.shape_cast %52 : vector<1x8x8xf32> to vector<8x8xf32>
    %54 = vector.extract_strided_slice %34 {offsets = [0, 8], sizes = [8, 8], strides = [1, 1]} : vector<8x96xf32> to vector<8x8xf32>
    %55 = vector.shape_cast %54 : vector<8x8xf32> to vector<1x8x8xf32>
    %56 = vector.extract_strided_slice %34 {offsets = [0, 40], sizes = [8, 8], strides = [1, 1]} : vector<8x96xf32> to vector<8x8xf32>
    %57 = vector.shape_cast %56 : vector<8x8xf32> to vector<1x8x8xf32>
    %58 = vector.extract_strided_slice %34 {offsets = [0, 72], sizes = [8, 8], strides = [1, 1]} : vector<8x96xf32> to vector<8x8xf32>
    %59 = vector.shape_cast %58 : vector<8x8xf32> to vector<1x8x8xf32>
    "tpu.trace_start"() <{level = 10 : i32, message = "bnd,bmd->bnm"}> : () -> ()
    %cst_20 = arith.constant dense<0.000000e+00> : vector<1x8x8xf32>
    %60 = tpu.matmul %55, %57, %cst_20 {dimension_numbers = #tpu.dot_dimension_numbers<[2], [2], [1], [1], [0, 0, 0, 1, 1, 1], [0], [0]>} : vector<1x8x8xf32>, vector<1x8x8xf32>, vector<1x8x8xf32> -> vector<1x8x8xf32>
    "tpu.trace_stop"() : () -> ()
    %cst_21 = arith.constant dense<0xFF800000> : vector<1x8xf32>
    %61 = vector.multi_reduction <maximumf>, %60, %cst_21 [2] : vector<1x8x8xf32> to vector<1x8xf32>
    %62 = vector.shape_cast %61 : vector<1x8xf32> to vector<1x8x1xf32>
    %63 = vector.broadcast %62 : vector<1x8x1xf32> to vector<1x8x8xf32>
    %64 = arith.subf %60, %63 : vector<1x8x8xf32>
    %65 = math.exp %64 : vector<1x8x8xf32>
    %cst_22 = arith.constant dense<0.000000e+00> : vector<1x8xf32>
    %66 = vector.multi_reduction <add>, %65, %cst_22 [2] : vector<1x8x8xf32> to vector<1x8xf32>
    %67 = vector.shape_cast %66 : vector<1x8xf32> to vector<1x8x1xf32>
    %68 = tpu.reciprocal %67 : vector<1x8x1xf32> -> vector<1x8x1xf32>
    %69 = vector.broadcast %68 : vector<1x8x1xf32> to vector<1x8x8xf32>
    %70 = arith.mulf %65, %69 : vector<1x8x8xf32>
    "tpu.trace_start"() <{level = 10 : i32, message = "bnm,bmd->bnd"}> : () -> ()
    %cst_23 = arith.constant dense<0.000000e+00> : vector<1x8x8xf32>
    %71 = tpu.matmul %70, %59, %cst_23 {dimension_numbers = #tpu.dot_dimension_numbers<[2], [1], [1], [2], [0, 0, 0, 1, 1, 2], [0], [0]>} : vector<1x8x8xf32>, vector<1x8x8xf32>, vector<1x8x8xf32> -> vector<1x8x8xf32>
    "tpu.trace_stop"() : () -> ()
    %72 = vector.shape_cast %71 : vector<1x8x8xf32> to vector<8x8xf32>
    %73 = vector.extract_strided_slice %34 {offsets = [0, 16], sizes = [8, 8], strides = [1, 1]} : vector<8x96xf32> to vector<8x8xf32>
    %74 = vector.shape_cast %73 : vector<8x8xf32> to vector<1x8x8xf32>
    %75 = vector.extract_strided_slice %34 {offsets = [0, 48], sizes = [8, 8], strides = [1, 1]} : vector<8x96xf32> to vector<8x8xf32>
    %76 = vector.shape_cast %75 : vector<8x8xf32> to vector<1x8x8xf32>
    %77 = vector.extract_strided_slice %34 {offsets = [0, 80], sizes = [8, 8], strides = [1, 1]} : vector<8x96xf32> to vector<8x8xf32>
    %78 = vector.shape_cast %77 : vector<8x8xf32> to vector<1x8x8xf32>
    "tpu.trace_start"() <{level = 10 : i32, message = "bnd,bmd->bnm"}> : () -> ()
    %cst_24 = arith.constant dense<0.000000e+00> : vector<1x8x8xf32>
    %79 = tpu.matmul %74, %76, %cst_24 {dimension_numbers = #tpu.dot_dimension_numbers<[2], [2], [1], [1], [0, 0, 0, 1, 1, 1], [0], [0]>} : vector<1x8x8xf32>, vector<1x8x8xf32>, vector<1x8x8xf32> -> vector<1x8x8xf32>
    "tpu.trace_stop"() : () -> ()
    %cst_25 = arith.constant dense<0xFF800000> : vector<1x8xf32>
    %80 = vector.multi_reduction <maximumf>, %79, %cst_25 [2] : vector<1x8x8xf32> to vector<1x8xf32>
    %81 = vector.shape_cast %80 : vector<1x8xf32> to vector<1x8x1xf32>
    %82 = vector.broadcast %81 : vector<1x8x1xf32> to vector<1x8x8xf32>
    %83 = arith.subf %79, %82 : vector<1x8x8xf32>
    %84 = math.exp %83 : vector<1x8x8xf32>
    %cst_26 = arith.constant dense<0.000000e+00> : vector<1x8xf32>
    %85 = vector.multi_reduction <add>, %84, %cst_26 [2] : vector<1x8x8xf32> to vector<1x8xf32>
    %86 = vector.shape_cast %85 : vector<1x8xf32> to vector<1x8x1xf32>
    %87 = tpu.reciprocal %86 : vector<1x8x1xf32> -> vector<1x8x1xf32>
    %88 = vector.broadcast %87 : vector<1x8x1xf32> to vector<1x8x8xf32>
    %89 = arith.mulf %84, %88 : vector<1x8x8xf32>
    "tpu.trace_start"() <{level = 10 : i32, message = "bnm,bmd->bnd"}> : () -> ()
    %cst_27 = arith.constant dense<0.000000e+00> : vector<1x8x8xf32>
    %90 = tpu.matmul %89, %78, %cst_27 {dimension_numbers = #tpu.dot_dimension_numbers<[2], [1], [1], [2], [0, 0, 0, 1, 1, 2], [0], [0]>} : vector<1x8x8xf32>, vector<1x8x8xf32>, vector<1x8x8xf32> -> vector<1x8x8xf32>
    "tpu.trace_stop"() : () -> ()
    %91 = vector.shape_cast %90 : vector<1x8x8xf32> to vector<8x8xf32>
    %92 = vector.extract_strided_slice %34 {offsets = [0, 24], sizes = [8, 8], strides = [1, 1]} : vector<8x96xf32> to vector<8x8xf32>
    %93 = vector.shape_cast %92 : vector<8x8xf32> to vector<1x8x8xf32>
    %94 = vector.extract_strided_slice %34 {offsets = [0, 56], sizes = [8, 8], strides = [1, 1]} : vector<8x96xf32> to vector<8x8xf32>
    %95 = vector.shape_cast %94 : vector<8x8xf32> to vector<1x8x8xf32>
    %96 = vector.extract_strided_slice %34 {offsets = [0, 88], sizes = [8, 8], strides = [1, 1]} : vector<8x96xf32> to vector<8x8xf32>
    %97 = vector.shape_cast %96 : vector<8x8xf32> to vector<1x8x8xf32>
    "tpu.trace_start"() <{level = 10 : i32, message = "bnd,bmd->bnm"}> : () -> ()
    %cst_28 = arith.constant dense<0.000000e+00> : vector<1x8x8xf32>
    %98 = tpu.matmul %93, %95, %cst_28 {dimension_numbers = #tpu.dot_dimension_numbers<[2], [2], [1], [1], [0, 0, 0, 1, 1, 1], [0], [0]>} : vector<1x8x8xf32>, vector<1x8x8xf32>, vector<1x8x8xf32> -> vector<1x8x8xf32>
    "tpu.trace_stop"() : () -> ()
    %cst_29 = arith.constant dense<0xFF800000> : vector<1x8xf32>
    %99 = vector.multi_reduction <maximumf>, %98, %cst_29 [2] : vector<1x8x8xf32> to vector<1x8xf32>
    %100 = vector.shape_cast %99 : vector<1x8xf32> to vector<1x8x1xf32>
    %101 = vector.broadcast %100 : vector<1x8x1xf32> to vector<1x8x8xf32>
    %102 = arith.subf %98, %101 : vector<1x8x8xf32>
    %103 = math.exp %102 : vector<1x8x8xf32>
    %cst_30 = arith.constant dense<0.000000e+00> : vector<1x8xf32>
    %104 = vector.multi_reduction <add>, %103, %cst_30 [2] : vector<1x8x8xf32> to vector<1x8xf32>
    %105 = vector.shape_cast %104 : vector<1x8xf32> to vector<1x8x1xf32>
    %106 = tpu.reciprocal %105 : vector<1x8x1xf32> -> vector<1x8x1xf32>
    %107 = vector.broadcast %106 : vector<1x8x1xf32> to vector<1x8x8xf32>
    %108 = arith.mulf %103, %107 : vector<1x8x8xf32>
    "tpu.trace_start"() <{level = 10 : i32, message = "bnm,bmd->bnd"}> : () -> ()
    %cst_31 = arith.constant dense<0.000000e+00> : vector<1x8x8xf32>
    %109 = tpu.matmul %108, %97, %cst_31 {dimension_numbers = #tpu.dot_dimension_numbers<[2], [1], [1], [2], [0, 0, 0, 1, 1, 2], [0], [0]>} : vector<1x8x8xf32>, vector<1x8x8xf32>, vector<1x8x8xf32> -> vector<1x8x8xf32>
    "tpu.trace_stop"() : () -> ()
    %110 = vector.shape_cast %109 : vector<1x8x8xf32> to vector<8x8xf32>
    %111 = tpu.concatenate %53, %72, %91, %110 in 1 : vector<8x8xf32>, vector<8x8xf32>, vector<8x8xf32>, vector<8x8xf32> -> vector<8x32xf32>
    %c0_32 = arith.constant 0 : index
    %c0_33 = arith.constant 0 : index
    %c0_34 = arith.constant 0 : index
    %112 = vector.load %arg6[%c0_32, %c0_33, %c0_34] : memref<1x32x32xf32, #tpu.memory_space<vmem>>, vector<1x32x32xf32>
    %113 = vector.shape_cast %112 : vector<1x32x32xf32> to vector<32x32xf32>
    %cst_35 = arith.constant dense<0.000000e+00> : vector<8x32xf32>
    %114 = tpu.matmul %111, %113, %cst_35 {dimension_numbers = #tpu.dot_dimension_numbers<[1], [0], [0], [1], [0, 0, 1, 1], [], []>} : vector<8x32xf32>, vector<32x32xf32>, vector<8x32xf32> -> vector<8x32xf32>
    %c0_36 = arith.constant 0 : index
    %c0_37 = arith.constant 0 : index
    %c0_38 = arith.constant 0 : index
    %115 = vector.load %arg7[%c0_36, %c0_37, %c0_38] : memref<1x1x32xf32, #tpu.memory_space<vmem>>, vector<1x1x32xf32>
    %116 = vector.shape_cast %115 : vector<1x1x32xf32> to vector<1x32xf32>
    %117 = vector.broadcast %116 : vector<1x32xf32> to vector<8x32xf32>
    %118 = arith.addf %114, %117 : vector<8x32xf32>
    %119 = arith.addf %3, %118 : vector<8x32xf32>
    %c0_39 = arith.constant 0 : index
    %c0_40 = arith.constant 0 : index
    %c0_41 = arith.constant 0 : index
    %120 = vector.load %arg8[%c0_39, %c0_40, %c0_41] : memref<1x1x32xf32, #tpu.memory_space<vmem>>, vector<1x1x32xf32>
    %121 = vector.shape_cast %120 : vector<1x1x32xf32> to vector<1x32xf32>
    %c0_42 = arith.constant 0 : index
    %c0_43 = arith.constant 0 : index
    %c0_44 = arith.constant 0 : index
    %122 = vector.load %arg9[%c0_42, %c0_43, %c0_44] : memref<1x1x32xf32, #tpu.memory_space<vmem>>, vector<1x1x32xf32>
    %123 = vector.shape_cast %122 : vector<1x1x32xf32> to vector<1x32xf32>
    %cst_45 = arith.constant dense<0.000000e+00> : vector<8xf32>
    %124 = vector.multi_reduction <add>, %119, %cst_45 [1] : vector<8x32xf32> to vector<8xf32>
    %125 = vector.shape_cast %124 : vector<8xf32> to vector<8x1xf32>
    %cst_46 = arith.constant 3.200000e+01 : f32
    %126 = vector.broadcast %cst_46 : f32 to vector<8x1xf32>
    %127 = arith.divf %125, %126 : vector<8x1xf32>
    %128 = vector.broadcast %127 : vector<8x1xf32> to vector<8x32xf32>
    %129 = arith.subf %119, %128 : vector<8x32xf32>
    %130 = vector.broadcast %127 : vector<8x1xf32> to vector<8x32xf32>
    %131 = arith.subf %119, %130 : vector<8x32xf32>
    %132 = arith.mulf %129, %131 : vector<8x32xf32>
    %cst_47 = arith.constant dense<0.000000e+00> : vector<8xf32>
    %133 = vector.multi_reduction <add>, %132, %cst_47 [1] : vector<8x32xf32> to vector<8xf32>
    %134 = vector.shape_cast %133 : vector<8xf32> to vector<8x1xf32>
    %cst_48 = arith.constant 3.200000e+01 : f32
    %135 = vector.broadcast %cst_48 : f32 to vector<8x1xf32>
    %136 = arith.divf %134, %135 : vector<8x1xf32>
    %137 = vector.broadcast %127 : vector<8x1xf32> to vector<8x32xf32>
    %138 = arith.subf %119, %137 : vector<8x32xf32>
    %cst_49 = arith.constant 9.99999974E-6 : f32
    %139 = vector.broadcast %cst_49 : f32 to vector<8x1xf32>
    %140 = arith.addf %136, %139 : vector<8x1xf32>
    %141 = math.rsqrt %140 : vector<8x1xf32>
    %142 = vector.broadcast %141 : vector<8x1xf32> to vector<8x32xf32>
    %143 = arith.mulf %138, %142 : vector<8x32xf32>
    %144 = vector.broadcast %121 : vector<1x32xf32> to vector<8x32xf32>
    %145 = arith.mulf %143, %144 : vector<8x32xf32>
    %146 = vector.broadcast %123 : vector<1x32xf32> to vector<8x32xf32>
    %147 = arith.addf %145, %146 : vector<8x32xf32>
    %c0_50 = arith.constant 0 : index
    %c0_51 = arith.constant 0 : index
    %c0_52 = arith.constant 0 : index
    %148 = vector.load %arg10[%c0_50, %c0_51, %c0_52] : memref<1x32x64xf32, #tpu.memory_space<vmem>>, vector<1x32x64xf32>
    %149 = vector.shape_cast %148 : vector<1x32x64xf32> to vector<32x64xf32>
    %cst_53 = arith.constant dense<0.000000e+00> : vector<8x64xf32>
    %150 = tpu.matmul %147, %149, %cst_53 {dimension_numbers = #tpu.dot_dimension_numbers<[1], [0], [0], [1], [0, 0, 1, 1], [], []>} : vector<8x32xf32>, vector<32x64xf32>, vector<8x64xf32> -> vector<8x64xf32>
    %c0_54 = arith.constant 0 : index
    %c0_55 = arith.constant 0 : index
    %c0_56 = arith.constant 0 : index
    %151 = vector.load %arg11[%c0_54, %c0_55, %c0_56] : memref<1x1x64xf32, #tpu.memory_space<vmem>>, vector<1x1x64xf32>
    %152 = vector.shape_cast %151 : vector<1x1x64xf32> to vector<1x64xf32>
    %153 = vector.broadcast %152 : vector<1x64xf32> to vector<8x64xf32>
    %154 = arith.addf %150, %153 : vector<8x64xf32>
    %cst_57 = arith.constant 0.000000e+00 : f32
    %155 = vector.broadcast %cst_57 : f32 to vector<8x64xf32>
    %156 = arith.maximumf %154, %155 : vector<8x64xf32>
    %c0_58 = arith.constant 0 : index
    %c0_59 = arith.constant 0 : index
    %c0_60 = arith.constant 0 : index
    %157 = vector.load %arg12[%c0_58, %c0_59, %c0_60] : memref<1x64x32xf32, #tpu.memory_space<vmem>>, vector<1x64x32xf32>
    %158 = vector.shape_cast %157 : vector<1x64x32xf32> to vector<64x32xf32>
    %cst_61 = arith.constant dense<0.000000e+00> : vector<8x32xf32>
    %159 = tpu.matmul %156, %158, %cst_61 {dimension_numbers = #tpu.dot_dimension_numbers<[1], [0], [0], [1], [0, 0, 1, 1], [], []>} : vector<8x64xf32>, vector<64x32xf32>, vector<8x32xf32> -> vector<8x32xf32>
    %c0_62 = arith.constant 0 : index
    %c0_63 = arith.constant 0 : index
    %c0_64 = arith.constant 0 : index
    %160 = vector.load %arg13[%c0_62, %c0_63, %c0_64] : memref<1x1x32xf32, #tpu.memory_space<vmem>>, vector<1x1x32xf32>
    %161 = vector.shape_cast %160 : vector<1x1x32xf32> to vector<1x32xf32>
    %162 = vector.broadcast %161 : vector<1x32xf32> to vector<8x32xf32>
    %163 = arith.addf %159, %162 : vector<8x32xf32>
    %164 = arith.addf %119, %163 : vector<8x32xf32>
    %c0_65 = arith.constant 0 : index
    %c0_66 = arith.constant 0 : index
    %165 = vector.load %arg15[%c0_65, %c0_66] : memref<8x32xf32, #tpu.memory_space<vmem>>, vector<8x32xf32>
    tpu.vector_store %arg15[%c0_65, %c0_66], %164 {strides = array<i32>} : memref<8x32xf32, #tpu.memory_space<vmem>>, vector<8x32xf32>,
    %c1_i32 = arith.constant 1 : i32
    %166 = arith.cmpi eq, %arg1, %c1_i32 : i32
    %167 = arith.extui %166 : i1 to i32
    %c0_i32_67 = arith.constant 0 : i32
    %168 = arith.cmpi ne, %167, %c0_i32_67 : i32
    scf.if %168 {
      %169 = vector.shape_cast %164 : vector<8x32xf32> to vector<1x8x32xf32>
      %c0_68 = arith.constant 0 : index
      %c0_69 = arith.constant 0 : index
      %c0_70 = arith.constant 0 : index
      %170 = vector.load %arg14[%c0_68, %c0_69, %c0_70] : memref<1x8x32xf32, #tpu.memory_space<vmem>>, vector<1x8x32xf32>
      tpu.vector_store %arg14[%c0_68, %c0_69, %c0_70], %169 {strides = array<i32>} : memref<1x8x32xf32, #tpu.memory_space<vmem>>, vector<1x8x32xf32>,
    } else {
    }
    return
  }
  func.func @transform_0(%arg0: i32, %arg1: i32) -> (i32, i32, i32) {
    %c0_i32 = arith.constant 0 : i32
    %c0_i32_0 = arith.constant 0 : i32
    %c0_i32_1 = arith.constant 0 : i32
    return %arg0, %c0_i32, %c0_i32_0 : i32, i32, i32
  }
  func.func @transform_1(%arg0: i32, %arg1: i32) -> (i32, i32, i32) {
    %c0_i32 = arith.constant 0 : i32
    %c0_i32_0 = arith.constant 0 : i32
    %c0_i32_1 = arith.constant 0 : i32
    return %arg1, %c0_i32, %c0_i32_0 : i32, i32, i32
  }
  func.func @transform_2(%arg0: i32, %arg1: i32) -> (i32, i32, i32) {
    %c0_i32 = arith.constant 0 : i32
    %c0_i32_0 = arith.constant 0 : i32
    %c0_i32_1 = arith.constant 0 : i32
    return %arg1, %c0_i32, %c0_i32_0 : i32, i32, i32
  }
  func.func @transform_3(%arg0: i32, %arg1: i32) -> (i32, i32, i32) {
    %c0_i32 = arith.constant 0 : i32
    %c0_i32_0 = arith.constant 0 : i32
    %c0_i32_1 = arith.constant 0 : i32
    return %arg1, %c0_i32, %c0_i32_0 : i32, i32, i32
  }
  func.func @transform_4(%arg0: i32, %arg1: i32) -> (i32, i32, i32) {
    %c0_i32 = arith.constant 0 : i32
    %c0_i32_0 = arith.constant 0 : i32
    %c0_i32_1 = arith.constant 0 : i32
    return %arg1, %c0_i32, %c0_i32_0 : i32, i32, i32
  }
  func.func @transform_5(%arg0: i32, %arg1: i32) -> (i32, i32, i32) {
    %c0_i32 = arith.constant 0 : i32
    %c0_i32_0 = arith.constant 0 : i32
    %c0_i32_1 = arith.constant 0 : i32
    return %arg1, %c0_i32, %c0_i32_0 : i32, i32, i32
  }
  func.func @transform_6(%arg0: i32, %arg1: i32) -> (i32, i32, i32) {
    %c0_i32 = arith.constant 0 : i32
    %c0_i32_0 = arith.constant 0 : i32
    %c0_i32_1 = arith.constant 0 : i32
    return %arg1, %c0_i32, %c0_i32_0 : i32, i32, i32
  }
  func.func @transform_7(%arg0: i32, %arg1: i32) -> (i32, i32, i32) {
    %c0_i32 = arith.constant 0 : i32
    %c0_i32_0 = arith.constant 0 : i32
    %c0_i32_1 = arith.constant 0 : i32
    return %arg1, %c0_i32, %c0_i32_0 : i32, i32, i32
  }
  func.func @transform_8(%arg0: i32, %arg1: i32) -> (i32, i32, i32) {
    %c0_i32 = arith.constant 0 : i32
    %c0_i32_0 = arith.constant 0 : i32
    %c0_i32_1 = arith.constant 0 : i32
    return %arg1, %c0_i32, %c0_i32_0 : i32, i32, i32
  }
  func.func @transform_9(%arg0: i32, %arg1: i32) -> (i32, i32, i32) {
    %c0_i32 = arith.constant 0 : i32
    %c0_i32_0 = arith.constant 0 : i32
    %c0_i32_1 = arith.constant 0 : i32
    return %arg1, %c0_i32, %c0_i32_0 : i32, i32, i32
  }
  func.func @transform_10(%arg0: i32, %arg1: i32) -> (i32, i32, i32) {
    %c0_i32 = arith.constant 0 : i32
    %c0_i32_0 = arith.constant 0 : i32
    %c0_i32_1 = arith.constant 0 : i32
    return %arg1, %c0_i32, %c0_i32_0 : i32, i32, i32
  }
  func.func @transform_11(%arg0: i32, %arg1: i32) -> (i32, i32, i32) {
    %c0_i32 = arith.constant 0 : i32
    %c0_i32_0 = arith.constant 0 : i32
    %c0_i32_1 = arith.constant 0 : i32
    return %arg1, %c0_i32, %c0_i32_0 : i32, i32, i32
  }
  func.func @transform_12(%arg0: i32, %arg1: i32) -> (i32, i32, i32) {
    %c0_i32 = arith.constant 0 : i32
    %c0_i32_0 = arith.constant 0 : i32
    %c0_i32_1 = arith.constant 0 : i32
    return %arg0, %c0_i32, %c0_i32_0 : i32, i32, i32
  }
}

</mosaic_0001>

<llo_original>
// kernel: tpu_custom_call.1
$region0: #{tpu_custom_call.1}
  #allocation0 [shape = 'u32[]', space=smem, size = 0x4, offset = 0x4, fixed_abs, tag = 'smem constant byte address 0x4 - core index']
  #allocation1 [shape = 'u32[144,128]{1,0:T(1,128)}', space=vmem, size = 0x12000, scoped, tag = 'internal scratch']
  #allocation2 [shape = 'f32[8,32]{1,0:T(8,128)}', space=vmem, size = 0x1000, scoped, tag = 'scratch operand']
  %s0 = inlined_call_operand.hbm [shape: f32[2,8,32], index: 0, kind: input, shape index: {}]
  %s1 = inlined_call_operand.hbm [shape: f32[2,1,32], index: 1, kind: input, shape index: {}]
  %s2 = inlined_call_operand.vmem [shape: f32[2,1,32], index: 2, kind: input, shape index: {}]
  %s3 = inlined_call_operand.vmem [shape: f32[2,32,96], index: 3, kind: input, shape index: {}]
  %s4 = inlined_call_operand.vmem [shape: f32[2,32,32], index: 4, kind: input, shape index: {}]
  %s5 = inlined_call_operand.vmem [shape: f32[2,1,32], index: 5, kind: input, shape index: {}]
  %s6 = inlined_call_operand.vmem [shape: f32[2,1,32], index: 6, kind: input, shape index: {}]
  %s7 = inlined_call_operand.vmem [shape: f32[2,1,32], index: 7, kind: input, shape index: {}]
  %s8 = inlined_call_operand.vmem [shape: f32[2,32,64], index: 8, kind: input, shape index: {}]
  %s9 = inlined_call_operand.vmem [shape: f32[2,1,64], index: 9, kind: input, shape index: {}]
  %s10 = inlined_call_operand.vmem [shape: f32[2,64,32], index: 10, kind: input, shape index: {}]
  %s11 = inlined_call_operand.vmem [shape: f32[2,1,32], index: 11, kind: input, shape index: {}]
  %s12 = inlined_call_operand.hbm [shape: f32[2,8,32], index: 12, kind: output, shape index: {}]
  %s13 = sld [smem:[#allocation0]]
  $region97: #{tpu_custom_call.1} parent=0
    _
  %s15 = ssub.s32 1, %s13
  %s16 = scalar_select 0, %s15, %s13
  $region1: #{tpu_custom_call.1} parent=0
    #allocation3 [shape = 'u8[8192]{0}', space=vmem, size = 0x2000, scoped, tag = 'input window, operand 0']
    #allocation4 [shape = 's32[2]{0}', space=sflag, size = 0x8, scoped, tag = 'scoped memory for tpu_custom_call.1']
    #allocation5 [shape = 's32[2]{0}', space=sflag, size = 0x8, scoped, tag = 'scoped memory for tpu_custom_call.1']
    #allocation6 [shape = 'u8[1024]{0}', space=vmem, size = 0x400, scoped, tag = 'input window, operand 1']
    #allocation7 [shape = 's32[2]{0}', space=sflag, size = 0x8, scoped, tag = 'scoped memory for tpu_custom_call.1']
    #allocation8 [shape = 'u8[8192]{0}', space=vmem, size = 0x2000, scoped, tag = 'output window, operand 0']
    %17 = vsyncpa [#allocation4], 0
    %s18 = scalar_lea.sflag [#allocation4], 1
    %19 = vsyncpa %s18, 0
    %20 = vsyncpa [#allocation7], 0
    %s21 = scalar_lea.sflag [#allocation7], 1
    %22 = vsyncpa %s21, 0
    %23 = vsyncpa [#allocation5], 0
    %s24 = scalar_lea.sflag [#allocation5], 1
    %25 = vsyncpa %s24, 0
    loop: start=0, step=1, limit=6
    $region2: #{tpu_custom_call.1} parent=1 // loop_pre_header
      _
    $region3: #{tpu_custom_call.1} parent=1 // loop_header
      %s27 = sphi 0, %s31
      %p28 = scmp.ge.s32.totalorder %s27, 6
      %s34 = sphi 0, %s46
      %s35 = sphi 0, %s42
      %s36 = sphi 0, %s34
      %s37 = sphi 0, %s35
      %s38 = sphi 0, %s36
      %s39 = sphi 0, %s37
      %s49 = sphi 0, %s51
      %s52 = sphi 0, %s49
      %s53 = sphi 0, %s52
      %s69 = sphi 0, %s53
      %s75 = sphi 0, %s77
      %s78 = sphi 0, %s75
      %s79 = sphi 0, %s78
      %s95 = sphi 0, %s79
      %s101 = sphi 0, %s103
      %s104 = sphi 0, %s101
      %s105 = sphi 0, %s104
      %s121 = sphi 0, %s105
      %s127 = sphi 0, %s129
      %s130 = sphi 0, %s127
      %s131 = sphi 0, %s130
      %s147 = sphi 0, %s131
      %s153 = sphi 0, %s155
      %s156 = sphi 0, %s153
      %s157 = sphi 0, %s156
      %s173 = sphi 0, %s157
      %s179 = sphi 0, %s181
      %s182 = sphi 0, %s179
      %s183 = sphi 0, %s182
      %s199 = sphi 0, %s183
      %s205 = sphi 0, %s207
      %s208 = sphi 0, %s205
      %s209 = sphi 0, %s208
      %s225 = sphi 0, %s209
      %s231 = sphi 0, %s233
      %s234 = sphi 0, %s231
      %s235 = sphi 0, %s234
      %s251 = sphi 0, %s235
      %s257 = sphi 0, %s259
      %s260 = sphi 0, %s257
      %s261 = sphi 0, %s260
      %s277 = sphi 0, %s261
      %s283 = sphi 0, %s285
      %s286 = sphi 0, %s283
      %s287 = sphi 0, %s286
      %s303 = sphi 0, %s287
      %s309 = sphi 0, %s311
      %s312 = sphi 0, %s309
      %s313 = sphi 0, %s312
      %s329 = sphi 0, %s313
      %s335 = sphi 0, %s337
      %s338 = sphi 0, %s335
      %s339 = sphi 0, %s338
      %s355 = sphi 0, %s339
      %s361 = sphi 0, %s363
      %s364 = sphi 0, %s361
      %s365 = sphi 0, %s364
      %s381 = sphi 0, %s365
    $region4: #{tpu_custom_call.1} parent=1 // loop_header_branch
      %30 = sbr.rel (%p28) target = $region8
    $region5: #{tpu_custom_call.1} parent=1 // loop_body
      %s32 = ssub.s32 %s27, 1
      %s33 = ssub.s32 %s27, 2
      %s40 = sadd.s32 1, %s35
      %p41 = scmp.ge.s32.totalorder %s40, 2
      %s42 = scalar_select %p41, 0, %s40
      %s43 = sadd.s32 1, %s34
      %s44 = scalar_select %p41, %s43, %s34
      %p45 = scmp.ge.s32.totalorder %s44, 2
      %s46 = scalar_select %p45, 0, %s44
      %s47 = ssub.s32 %s34, %s46
      %p48 = scmp.eq.s32.totalorder %s47, 0
      %s50 = sadd.s32 %s49, 1
      %s51 = scalar_select %p48, %s49, %s50
      %p54 = pneg %p48
      %p55 = scmp.eq.s32.totalorder %s27, 3
      %p56 = por %p54, %p55
      %p57 = scmp.ne.s32.totalorder %s49, %s52
      %p58 = scmp.eq.s32.totalorder %s27, 0
      %p59 = por %p57, %p58
      %p60 = scmp.ne.s32.totalorder %s49, %s52
      %p61 = scmp.eq.s32.totalorder %s32, 3
      %p62 = por %p60, %p61
      %p63 = scmp.ne.s32.totalorder %s52, %s53
      %p64 = scmp.eq.s32.totalorder %s32, 0
      %p65 = por %p63, %p64
      %p66 = scmp.ne.s32.totalorder %s52, %s53
      %p67 = scmp.eq.s32.totalorder %s33, 3
      %p68 = por %p66, %p67
      %p70 = scmp.ne.s32.totalorder %s53, %s69
      %p71 = scmp.eq.s32.totalorder %s33, 0
      %p72 = por %p70, %p71
      %s73 = ssub.s32 %s35, %s42
      %p74 = scmp.eq.s32.totalorder %s73, 0
      %s76 = sadd.s32 %s75, 1
      %s77 = scalar_select %p74, %s75, %s76
      %p80 = pneg %p74
      %p81 = scmp.eq.s32.totalorder %s27, 3
      %p82 = por %p80, %p81
      %p83 = scmp.ne.s32.totalorder %s75, %s78
      %p84 = scmp.eq.s32.totalorder %s27, 0
      %p85 = por %p83, %p84
      %p86 = scmp.ne.s32.totalorder %s75, %s78
      %p87 = scmp.eq.s32.totalorder %s32, 3
      %p88 = por %p86, %p87
      %p89 = scmp.ne.s32.totalorder %s78, %s79
      %p90 = scmp.eq.s32.totalorder %s32, 0
      %p91 = por %p89, %p90
      %p92 = scmp.ne.s32.totalorder %s78, %s79
      %p93 = scmp.eq.s32.totalorder %s33, 3
      %p94 = por %p92, %p93
      %p96 = scmp.ne.s32.totalorder %s79, %s95
      %p97 = scmp.eq.s32.totalorder %s33, 0
      %p98 = por %p96, %p97
      %s99 = ssub.s32 %s35, %s42
      %p100 = scmp.eq.s32.totalorder %s99, 0
      %s102 = sadd.s32 %s101, 1
      %s103 = scalar_select %p100, %s101, %s102
      %p106 = pneg %p100
      %p107 = scmp.eq.s32.totalorder %s27, 3
      %p108 = por %p106, %p107
      %p109 = scmp.ne.s32.totalorder %s101, %s104
      %p110 = scmp.eq.s32.totalorder %s27, 0
      %p111 = por %p109, %p110
      %p112 = scmp.ne.s32.totalorder %s101, %s104
      %p113 = scmp.eq.s32.totalorder %s32, 3
      %p114 = por %p112, %p113
      %p115 = scmp.ne.s32.totalorder %s104, %s105
      %p116 = scmp.eq.s32.totalorder %s32, 0
      %p117 = por %p115, %p116
      %p118 = scmp.ne.s32.totalorder %s104, %s105
      %p119 = scmp.eq.s32.totalorder %s33, 3
      %p120 = por %p118, %p119
      %p122 = scmp.ne.s32.totalorder %s105, %s121
      %p123 = scmp.eq.s32.totalorder %s33, 0
      %p124 = por %p122, %p123
      %s125 = ssub.s32 %s35, %s42
      %p126 = scmp.eq.s32.totalorder %s125, 0
      %s128 = sadd.s32 %s127, 1
      %s129 = scalar_select %p126, %s127, %s128
      %p132 = pneg %p126
      %p133 = scmp.eq.s32.totalorder %s27, 3
      %p134 = por %p132, %p133
      %p135 = scmp.ne.s32.totalorder %s127, %s130
      %p136 = scmp.eq.s32.totalorder %s27, 0
      %p137 = por %p135, %p136
      %p138 = scmp.ne.s32.totalorder %s127, %s130
      %p139 = scmp.eq.s32.totalorder %s32, 3
      %p140 = por %p138, %p139
      %p141 = scmp.ne.s32.totalorder %s130, %s131
      %p142 = scmp.eq.s32.totalorder %s32, 0
      %p143 = por %p141, %p142
      %p144 = scmp.ne.s32.totalorder %s130, %s131
      %p145 = scmp.eq.s32.totalorder %s33, 3
      %p146 = por %p144, %p145
      %p148 = scmp.ne.s32.totalorder %s131, %s147
      %p149 = scmp.eq.s32.totalorder %s33, 0
      %p150 = por %p148, %p149
      %s151 = ssub.s32 %s35, %s42
      %p152 = scmp.eq.s32.totalorder %s151, 0
      %s154 = sadd.s32 %s153, 1
      %s155 = scalar_select %p152, %s153, %s154
      %p158 = pneg %p152
      %p159 = scmp.eq.s32.totalorder %s27, 3
      %p160 = por %p158, %p159
      %p161 = scmp.ne.s32.totalorder %s153, %s156
      %p162 = scmp.eq.s32.totalorder %s27, 0
      %p163 = por %p161, %p162
      %p164 = scmp.ne.s32.totalorder %s153, %s156
      %p165 = scmp.eq.s32.totalorder %s32, 3
      %p166 = por %p164, %p165
      %p167 = scmp.ne.s32.totalorder %s156, %s157
      %p168 = scmp.eq.s32.totalorder %s32, 0
      %p169 = por %p167, %p168
      %p170 = scmp.ne.s32.totalorder %s156, %s157
      %p171 = scmp.eq.s32.totalorder %s33, 3
      %p172 = por %p170, %p171
      %p174 = scmp.ne.s32.totalorder %s157, %s173
      %p175 = scmp.eq.s32.totalorder %s33, 0
      %p176 = por %p174, %p175
      %s177 = ssub.s32 %s35, %s42
      %p178 = scmp.eq.s32.totalorder %s177, 0
      %s180 = sadd.s32 %s179, 1
      %s181 = scalar_select %p178, %s179, %s180
      %p184 = pneg %p178
      %p185 = scmp.eq.s32.totalorder %s27, 3
      %p186 = por %p184, %p185
      %p187 = scmp.ne.s32.totalorder %s179, %s182
      %p188 = scmp.eq.s32.totalorder %s27, 0
      %p189 = por %p187, %p188
      %p190 = scmp.ne.s32.totalorder %s179, %s182
      %p191 = scmp.eq.s32.totalorder %s32, 3
      %p192 = por %p190, %p191
      %p193 = scmp.ne.s32.totalorder %s182, %s183
      %p194 = scmp.eq.s32.totalorder %s32, 0
      %p195 = por %p193, %p194
      %p196 = scmp.ne.s32.totalorder %s182, %s183
      %p197 = scmp.eq.s32.totalorder %s33, 3
      %p198 = por %p196, %p197
      %p200 = scmp.ne.s32.totalorder %s183, %s199
      %p201 = scmp.eq.s32.totalorder %s33, 0
      %p202 = por %p200, %p201
      %s203 = ssub.s32 %s35, %s42
      %p204 = scmp.eq.s32.totalorder %s203, 0
      %s206 = sadd.s32 %s205, 1
      %s207 = scalar_select %p204, %s205, %s206
      %p210 = pneg %p204
      %p211 = scmp.eq.s32.totalorder %s27, 3
      %p212 = por %p210, %p211
      %p213 = scmp.ne.s32.totalorder %s205, %s208
      %p214 = scmp.eq.s32.totalorder %s27, 0
      %p215 = por %p213, %p214
      %p216 = scmp.ne.s32.totalorder %s205, %s208
      %p217 = scmp.eq.s32.totalorder %s32, 3
      %p218 = por %p216, %p217
      %p219 = scmp.ne.s32.totalorder %s208, %s209
      %p220 = scmp.eq.s32.totalorder %s32, 0
      %p221 = por %p219, %p220
      %p222 = scmp.ne.s32.totalorder %s208, %s209
      %p223 = scmp.eq.s32.totalorder %s33, 3
      %p224 = por %p222, %p223
      %p226 = scmp.ne.s32.totalorder %s209, %s225
      %p227 = scmp.eq.s32.totalorder %s33, 0
      %p228 = por %p226, %p227
      %s229 = ssub.s32 %s35, %s42
      %p230 = scmp.eq.s32.totalorder %s229, 0
      %s232 = sadd.s32 %s231, 1
      %s233 = scalar_select %p230, %s231, %s232
      %p236 = pneg %p230
      %p237 = scmp.eq.s32.totalorder %s27, 3
      %p238 = por %p236, %p237
      %p239 = scmp.ne.s32.totalorder %s231, %s234
      %p240 = scmp.eq.s32.totalorder %s27, 0
      %p241 = por %p239, %p240
      %p242 = scmp.ne.s32.totalorder %s231, %s234
      %p243 = scmp.eq.s32.totalorder %s32, 3
      %p244 = por %p242, %p243
      %p245 = scmp.ne.s32.totalorder %s234, %s235
      %p246 = scmp.eq.s32.totalorder %s32, 0
      %p247 = por %p245, %p246
      %p248 = scmp.ne.s32.totalorder %s234, %s235
      %p249 = scmp.eq.s32.totalorder %s33, 3
      %p250 = por %p248, %p249
      %p252 = scmp.ne.s32.totalorder %s235, %s251
      %p253 = scmp.eq.s32.totalorder %s33, 0
      %p254 = por %p252, %p253
      %s255 = ssub.s32 %s35, %s42
      %p256 = scmp.eq.s32.totalorder %s255, 0
      %s258 = sadd.s32 %s257, 1
      %s259 = scalar_select %p256, %s257, %s258
      %p262 = pneg %p256
      %p263 = scmp.eq.s32.totalorder %s27, 3
      %p264 = por %p262, %p263
      %p265 = scmp.ne.s32.totalorder %s257, %s260
      %p266 = scmp.eq.s32.totalorder %s27, 0
      %p267 = por %p265, %p266
      %p268 = scmp.ne.s32.totalorder %s257, %s260
      %p269 = scmp.eq.s32.totalorder %s32, 3
      %p270 = por %p268, %p269
      %p271 = scmp.ne.s32.totalorder %s260, %s261
      %p272 = scmp.eq.s32.totalorder %s32, 0
      %p273 = por %p271, %p272
      %p274 = scmp.ne.s32.totalorder %s260, %s261
      %p275 = scmp.eq.s32.totalorder %s33, 3
      %p276 = por %p274, %p275
      %p278 = scmp.ne.s32.totalorder %s261, %s277
      %p279 = scmp.eq.s32.totalorder %s33, 0
      %p280 = por %p278, %p279
      %s281 = ssub.s32 %s35, %s42
      %p282 = scmp.eq.s32.totalorder %s281, 0
      %s284 = sadd.s32 %s283, 1
      %s285 = scalar_select %p282, %s283, %s284
      %p288 = pneg %p282
      %p289 = scmp.eq.s32.totalorder %s27, 3
      %p290 = por %p288, %p289
      %p291 = scmp.ne.s32.totalorder %s283, %s286
      %p292 = scmp.eq.s32.totalorder %s27, 0
      %p293 = por %p291, %p292
      %p294 = scmp.ne.s32.totalorder %s283, %s286
      %p295 = scmp.eq.s32.totalorder %s32, 3
      %p296 = por %p294, %p295
      %p297 = scmp.ne.s32.totalorder %s286, %s287
      %p298 = scmp.eq.s32.totalorder %s32, 0
      %p299 = por %p297, %p298
      %p300 = scmp.ne.s32.totalorder %s286, %s287
      %p301 = scmp.eq.s32.totalorder %s33, 3
      %p302 = por %p300, %p301
      %p304 = scmp.ne.s32.totalorder %s287, %s303
      %p305 = scmp.eq.s32.totalorder %s33, 0
      %p306 = por %p304, %p305
      %s307 = ssub.s32 %s35, %s42
      %p308 = scmp.eq.s32.totalorder %s307, 0
      %s310 = sadd.s32 %s309, 1
      %s311 = scalar_select %p308, %s309, %s310
      %p314 = pneg %p308
      %p315 = scmp.eq.s32.totalorder %s27, 3
      %p316 = por %p314, %p315
      %p317 = scmp.ne.s32.totalorder %s309, %s312
      %p318 = scmp.eq.s32.totalorder %s27, 0
      %p319 = por %p317, %p318
      %p320 = scmp.ne.s32.totalorder %s309, %s312
      %p321 = scmp.eq.s32.totalorder %s32, 3
      %p322 = por %p320, %p321
      %p323 = scmp.ne.s32.totalorder %s312, %s313
      %p324 = scmp.eq.s32.totalorder %s32, 0
      %p325 = por %p323, %p324
      %p326 = scmp.ne.s32.totalorder %s312, %s313
      %p327 = scmp.eq.s32.totalorder %s33, 3
      %p328 = por %p326, %p327
      %p330 = scmp.ne.s32.totalorder %s313, %s329
      %p331 = scmp.eq.s32.totalorder %s33, 0
      %p332 = por %p330, %p331
      %s333 = ssub.s32 %s35, %s42
      %p334 = scmp.eq.s32.totalorder %s333, 0
      %s336 = sadd.s32 %s335, 1
      %s337 = scalar_select %p334, %s335, %s336
      %p340 = pneg %p334
      %p341 = scmp.eq.s32.totalorder %s27, 3
      %p342 = por %p340, %p341
      %p343 = scmp.ne.s32.totalorder %s335, %s338
      %p344 = scmp.eq.s32.totalorder %s27, 0
      %p345 = por %p343, %p344
      %p346 = scmp.ne.s32.totalorder %s335, %s338
      %p347 = scmp.eq.s32.totalorder %s32, 3
      %p348 = por %p346, %p347
      %p349 = scmp.ne.s32.totalorder %s338, %s339
      %p350 = scmp.eq.s32.totalorder %s32, 0
      %p351 = por %p349, %p350
      %p352 = scmp.ne.s32.totalorder %s338, %s339
      %p353 = scmp.eq.s32.totalorder %s33, 3
      %p354 = por %p352, %p353
      %p356 = scmp.ne.s32.totalorder %s339, %s355
      %p357 = scmp.eq.s32.totalorder %s33, 0
      %p358 = por %p356, %p357
      %s359 = ssub.s32 %s34, %s46
      %p360 = scmp.eq.s32.totalorder %s359, 0
      %s362 = sadd.s32 %s361, 1
      %s363 = scalar_select %p360, %s361, %s362
      %p366 = pneg %p360
      %p367 = scmp.eq.s32.totalorder %s27, 3
      %p368 = por %p366, %p367
      %p369 = scmp.ne.s32.totalorder %s361, %s364
      %p370 = scmp.eq.s32.totalorder %s27, 0
      %p371 = por %p369, %p370
      %p372 = scmp.ne.s32.totalorder %s361, %s364
      %p373 = scmp.eq.s32.totalorder %s32, 3
      %p374 = por %p372, %p373
      %p375 = scmp.ne.s32.totalorder %s364, %s365
      %p376 = scmp.eq.s32.totalorder %s32, 0
      %p377 = por %p375, %p376
      %p378 = scmp.ne.s32.totalorder %s364, %s365
      %p379 = scmp.eq.s32.totalorder %s33, 3
      %p380 = por %p378, %p379
      %p382 = scmp.ne.s32.totalorder %s365, %s381
      %p383 = scmp.eq.s32.totalorder %s33, 0
      %p384 = por %p382, %p383
      %p385 = scmp.le.s32.totalorder 1, %s27
      %p386 = scmp.lt.s32.totalorder %s27, 5
      %p387 = pnand %p385, %p386
      %p388 = pneg %p387
      // Predicated region
      $region9: #{tpu_custom_call.1} parent=5 // pred_check
        _
      $region10: #{tpu_custom_call.1} parent=5 // pred_check_branch
        %390 = sbr.rel (%p387) target = $region12
      $region11: #{tpu_custom_call.1} parent=5 // pred_region
        %s391 = ssub.s32 %s27, 1
      $region12: #{tpu_custom_call.1} parent=5 // pred_fallthru
        _
      %p392 = scmp.lt.s32.totalorder %s27, 4
      // Predicated region
      $region13: #{tpu_custom_call.1} parent=5 // pred_check
        %p393 = pneg %p392
      $region14: #{tpu_custom_call.1} parent=5 // pred_check_branch
        %395 = sbr.rel (%p393) target = $region16
      $region15: #{tpu_custom_call.1} parent=5 // pred_region
        // Predicated region
        $region17: #{tpu_custom_call.1} parent=15 // pred_check
          %p396 = pneg %p59
        $region18: #{tpu_custom_call.1} parent=15 // pred_check_branch
          %398 = sbr.rel (%p396) target = $region20
        $region19: #{tpu_custom_call.1} parent=15 // pred_region
          %s399 = sand.u32 %s49, 1
          %s400 = scalar_lea.sflag [#allocation4], %s399
          %s401 = sand.u32 %s49, 1
          %s402 = smul.addr %s401, 8
          %s403 = scalar_lea.vmem [#allocation3], %s402
          %s405 = ssub.s32 128, 128
          %406 = vsyncadd %s400, %s405
          %s407 = smul.addr %s34, 128
          %s408 = scalar_lea.hbm %s0, %s407
          %s410 = sshll.u32 %s403, 4
          %s411 = int_to_ptr.vmem [resolvable:$true] %s410
          %413 = dma.hbm_to_vmem [thread:$0]  %s408, 128, %s411, %s400
        $region20: #{tpu_custom_call.1} parent=15 // pred_fallthru
          _
        // Predicated region
        $region21: #{tpu_custom_call.1} parent=15 // pred_check
          %p414 = pneg %p85
        $region22: #{tpu_custom_call.1} parent=15 // pred_check_branch
          %416 = sbr.rel (%p414) target = $region24
        $region23: #{tpu_custom_call.1} parent=15 // pred_region
          %s417 = sand.u32 %s75, 1
          %s418 = scalar_lea.sflag [#allocation7], %s417
          %s419 = sand.u32 %s75, 1
          %s420 = scalar_lea.vmem [#allocation6], %s419
          %s422 = ssub.s32 16, 16
          %423 = vsyncadd %s418, %s422
          %s424 = smul.addr %s35, 16
          %s425 = scalar_lea.hbm %s1, %s424
          %s427 = sshll.u32 %s420, 4
          %s428 = int_to_ptr.vmem [resolvable:$true] %s427
          %430 = dma.hbm_to_vmem [thread:$0]  %s425, 16, %s428, %s418
        $region24: #{tpu_custom_call.1} parent=15 // pred_fallthru
          _
        // Predicated region
        $region25: #{tpu_custom_call.1} parent=15 // pred_check
          %p431 = pneg %p111
        $region26: #{tpu_custom_call.1} parent=15 // pred_check_branch
          %433 = sbr.rel (%p431) target = $region28
        $region27: #{tpu_custom_call.1} parent=15 // pred_region
          %p434 = scmp.lt.s32.totalorder %s35, 1
          %s435 = scalar_select %p434, %s35, 1
          %s436 = scalar_lea.vmem %s2, %s435
        $region28: #{tpu_custom_call.1} parent=15 // pred_fallthru
          _
        // Predicated region
        $region29: #{tpu_custom_call.1} parent=15 // pred_check
          %p437 = pneg %p137
        $region30: #{tpu_custom_call.1} parent=15 // pred_check_branch
          %439 = sbr.rel (%p437) target = $region32
        $region31: #{tpu_custom_call.1} parent=15 // pred_region
          %p440 = scmp.lt.s32.totalorder %s35, 1
          %s441 = scalar_select %p440, %s35, 1
          %s442 = smul.addr %s441, 4
          %s443 = smul.addr %s442, 8
          %s444 = scalar_lea.vmem %s3, %s443
        $region32: #{tpu_custom_call.1} parent=15 // pred_fallthru
          _
        // Predicated region
        $region33: #{tpu_custom_call.1} parent=15 // pred_check
          %p445 = pneg %p163
        $region34: #{tpu_custom_call.1} parent=15 // pred_check_branch
          %447 = sbr.rel (%p445) target = $region36
        $region35: #{tpu_custom_call.1} parent=15 // pred_region
          %p448 = scmp.lt.s32.totalorder %s35, 1
          %s449 = scalar_select %p448, %s35, 1
          %s450 = smul.addr %s449, 4
          %s451 = smul.addr %s450, 8
          %s452 = scalar_lea.vmem %s4, %s451
        $region36: #{tpu_custom_call.1} parent=15 // pred_fallthru
          _
        // Predicated region
        $region37: #{tpu_custom_call.1} parent=15 // pred_check
          %p453 = pneg %p189
        $region38: #{tpu_custom_call.1} parent=15 // pred_check_branch
          %455 = sbr.rel (%p453) target = $region40
        $region39: #{tpu_custom_call.1} parent=15 // pred_region
          %p456 = scmp.lt.s32.totalorder %s35, 1
          %s457 = scalar_select %p456, %s35, 1
          %s458 = scalar_lea.vmem %s5, %s457
        $region40: #{tpu_custom_call.1} parent=15 // pred_fallthru
          _
        // Predicated region
        $region41: #{tpu_custom_call.1} parent=15 // pred_check
          %p459 = pneg %p215
        $region42: #{tpu_custom_call.1} parent=15 // pred_check_branch
          %461 = sbr.rel (%p459) target = $region44
        $region43: #{tpu_custom_call.1} parent=15 // pred_region
          %p462 = scmp.lt.s32.totalorder %s35, 1
          %s463 = scalar_select %p462, %s35, 1
          %s464 = scalar_lea.vmem %s6, %s463
        $region44: #{tpu_custom_call.1} parent=15 // pred_fallthru
          _
        // Predicated region
        $region45: #{tpu_custom_call.1} parent=15 // pred_check
          %p465 = pneg %p241
        $region46: #{tpu_custom_call.1} parent=15 // pred_check_branch
          %467 = sbr.rel (%p465) target = $region48
        $region47: #{tpu_custom_call.1} parent=15 // pred_region
          %p468 = scmp.lt.s32.totalorder %s35, 1
          %s469 = scalar_select %p468, %s35, 1
          %s470 = scalar_lea.vmem %s7, %s469
        $region48: #{tpu_custom_call.1} parent=15 // pred_fallthru
          _
        // Predicated region
        $region49: #{tpu_custom_call.1} parent=15 // pred_check
          %p471 = pneg %p267
        $region50: #{tpu_custom_call.1} parent=15 // pred_check_branch
          %473 = sbr.rel (%p471) target = $region52
        $region51: #{tpu_custom_call.1} parent=15 // pred_region
          %p474 = scmp.lt.s32.totalorder %s35, 1
          %s475 = scalar_select %p474, %s35, 1
          %s476 = smul.addr %s475, 4
          %s477 = smul.addr %s476, 8
          %s478 = scalar_lea.vmem %s8, %s477
        $region52: #{tpu_custom_call.1} parent=15 // pred_fallthru
          _
        // Predicated region
        $region53: #{tpu_custom_call.1} parent=15 // pred_check
          %p479 = pneg %p293
        $region54: #{tpu_custom_call.1} parent=15 // pred_check_branch
          %481 = sbr.rel (%p479) target = $region56
        $region55: #{tpu_custom_call.1} parent=15 // pred_region
          %p482 = scmp.lt.s32.totalorder %s35, 1
          %s483 = scalar_select %p482, %s35, 1
          %s484 = scalar_lea.vmem %s9, %s483
        $region56: #{tpu_custom_call.1} parent=15 // pred_fallthru
          _
        // Predicated region
        $region57: #{tpu_custom_call.1} parent=15 // pred_check
          %p485 = pneg %p319
        $region58: #{tpu_custom_call.1} parent=15 // pred_check_branch
          %487 = sbr.rel (%p485) target = $region60
        $region59: #{tpu_custom_call.1} parent=15 // pred_region
          %p488 = scmp.lt.s32.totalorder %s35, 1
          %s489 = scalar_select %p488, %s35, 1
          %s490 = smul.addr %s489, 8
          %s491 = smul.addr %s490, 8
          %s492 = scalar_lea.vmem %s10, %s491
        $region60: #{tpu_custom_call.1} parent=15 // pred_fallthru
          _
        // Predicated region
        $region61: #{tpu_custom_call.1} parent=15 // pred_check
          %p493 = pneg %p345
        $region62: #{tpu_custom_call.1} parent=15 // pred_check_branch
          %495 = sbr.rel (%p493) target = $region64
        $region63: #{tpu_custom_call.1} parent=15 // pred_region
          %p496 = scmp.lt.s32.totalorder %s35, 1
          %s497 = scalar_select %p496, %s35, 1
          %s498 = scalar_lea.vmem %s11, %s497
        $region64: #{tpu_custom_call.1} parent=15 // pred_fallthru
          _
      $region16: #{tpu_custom_call.1} parent=5 // pred_fallthru
        _
      %p499 = scmp.le.s32.totalorder 1, %s27
      %p500 = scmp.lt.s32.totalorder %s27, 5
      %p501 = pnand %p499, %p500
      %p502 = pneg %p501
      // Predicated region
      $region65: #{tpu_custom_call.1} parent=5 // pred_check
        _
      $region66: #{tpu_custom_call.1} parent=5 // pred_check_branch
        %504 = sbr.rel (%p501) target = $region68
      $region67: #{tpu_custom_call.1} parent=5 // pred_region
        %s505 = ssub.s32 %s27, 1
        %s506 = sand.u32 %s52, 1
        %s507 = scalar_lea.sflag [#allocation4], %s506
        %s508 = sand.u32 %s52, 1
        %s509 = smul.addr %s508, 8
        %s510 = scalar_lea.vmem [#allocation3], %s509
        // Predicated region
        $region69: #{tpu_custom_call.1} parent=67 // pred_check
          %p511 = pneg %p65
        $region70: #{tpu_custom_call.1} parent=67 // pred_check_branch
          %513 = sbr.rel (%p511) target = $region72
        $region71: #{tpu_custom_call.1} parent=67 // pred_region
          %514 = dma.done %s507, 128
        $region72: #{tpu_custom_call.1} parent=67 // pred_fallthru
          _
        %s515 = sand.u32 %s78, 1
        %s516 = scalar_lea.sflag [#allocation7], %s515
        %s517 = sand.u32 %s78, 1
        %s518 = scalar_lea.vmem [#allocation6], %s517
        // Predicated region
        $region73: #{tpu_custom_call.1} parent=67 // pred_check
          %p519 = pneg %p91
        $region74: #{tpu_custom_call.1} parent=67 // pred_check_branch
          %521 = sbr.rel (%p519) target = $region76
        $region75: #{tpu_custom_call.1} parent=67 // pred_region
          %522 = dma.done %s516, 16
        $region76: #{tpu_custom_call.1} parent=67 // pred_fallthru
          _
        %s523 = sand.u32 %s52, 1
        %s524 = scalar_lea.sflag [#allocation4], %s523
        %s525 = sand.u32 %s52, 1
        %s526 = smul.addr %s525, 8
        %s527 = scalar_lea.vmem [#allocation3], %s526
        %p528 = pneg %p65
        %p529 = pneg %p62
        %s530 = sand.u32 %s78, 1
        %s531 = scalar_lea.sflag [#allocation7], %s530
        %s532 = sand.u32 %s78, 1
        %s533 = scalar_lea.vmem [#allocation6], %s532
        %p534 = pneg %p91
        %p535 = pneg %p88
        %p536 = scmp.lt.s32.totalorder %s37, 1
        %s537 = scalar_select %p536, %s37, 1
        %s538 = scalar_lea.vmem %s2, %s537
        %p539 = pneg %p117
        %p540 = pneg %p114
        %p541 = scmp.lt.s32.totalorder %s37, 1
        %s542 = scalar_select %p541, %s37, 1
        %s543 = smul.addr %s542, 4
        %s544 = smul.addr %s543, 8
        %s545 = scalar_lea.vmem %s3, %s544
        %p546 = pneg %p143
        %p547 = pneg %p140
        %p548 = scmp.lt.s32.totalorder %s37, 1
        %s549 = scalar_select %p548, %s37, 1
        %s550 = smul.addr %s549, 4
        %s551 = smul.addr %s550, 8
        %s552 = scalar_lea.vmem %s4, %s551
        %p553 = pneg %p169
        %p554 = pneg %p166
        %p555 = scmp.lt.s32.totalorder %s37, 1
        %s556 = scalar_select %p555, %s37, 1
        %s557 = scalar_lea.vmem %s5, %s556
        %p558 = pneg %p195
        %p559 = pneg %p192
        %p560 = scmp.lt.s32.totalorder %s37, 1
        %s561 = scalar_select %p560, %s37, 1
        %s562 = scalar_lea.vmem %s6, %s561
        %p563 = pneg %p221
        %p564 = pneg %p218
        %p565 = scmp.lt.s32.totalorder %s37, 1
        %s566 = scalar_select %p565, %s37, 1
        %s567 = scalar_lea.vmem %s7, %s566
        %p568 = pneg %p247
        %p569 = pneg %p244
        %p570 = scmp.lt.s32.totalorder %s37, 1
        %s571 = scalar_select %p570, %s37, 1
        %s572 = smul.addr %s571, 4
        %s573 = smul.addr %s572, 8
        %s574 = scalar_lea.vmem %s8, %s573
        %p575 = pneg %p273
        %p576 = pneg %p270
        %p577 = scmp.lt.s32.totalorder %s37, 1
        %s578 = scalar_select %p577, %s37, 1
        %s579 = scalar_lea.vmem %s9, %s578
        %p580 = pneg %p299
        %p581 = pneg %p296
        %p582 = scmp.lt.s32.totalorder %s37, 1
        %s583 = scalar_select %p582, %s37, 1
        %s584 = smul.addr %s583, 8
        %s585 = smul.addr %s584, 8
        %s586 = scalar_lea.vmem %s10, %s585
        %p587 = pneg %p325
        %p588 = pneg %p322
        %p589 = scmp.lt.s32.totalorder %s37, 1
        %s590 = scalar_select %p589, %s37, 1
        %s591 = scalar_lea.vmem %s11, %s590
        %p592 = pneg %p351
        %p593 = pneg %p348
        %p594 = pneg %p377
        %p595 = pneg %p374
        %s596 = sand.u32 %s364, 1
        %s597 = scalar_lea.sflag [#allocation5], %s596
        %s598 = sand.u32 %s364, 1
        %s599 = smul.addr %s598, 8
        %s600 = scalar_lea.vmem [#allocation8], %s599
        %p601 = scmp.lt.s32.totalorder %s37, 1
        %s602 = scalar_select %p601, %s37, 1
        %s603 = scalar_lea.vmem %s2, %s602
        %p604 = scmp.lt.s32.totalorder %s37, 1
        %s605 = scalar_select %p604, %s37, 1
        %s606 = smul.addr %s605, 4
        %s607 = smul.addr %s606, 8
        %s608 = scalar_lea.vmem %s3, %s607
        %p609 = scmp.lt.s32.totalorder %s37, 1
        %s610 = scalar_select %p609, %s37, 1
        %s611 = smul.addr %s610, 4
        %s612 = smul.addr %s611, 8
        %s613 = scalar_lea.vmem %s4, %s612
        %p614 = scmp.lt.s32.totalorder %s37, 1
        %s615 = scalar_select %p614, %s37, 1
        %s616 = scalar_lea.vmem %s5, %s615
        %p617 = scmp.lt.s32.totalorder %s37, 1
        %s618 = scalar_select %p617, %s37, 1
        %s619 = scalar_lea.vmem %s6, %s618
        %p620 = scmp.lt.s32.totalorder %s37, 1
        %s621 = scalar_select %p620, %s37, 1
        %s622 = scalar_lea.vmem %s7, %s621
        %p623 = scmp.lt.s32.totalorder %s37, 1
        %s624 = scalar_select %p623, %s37, 1
        %s625 = smul.addr %s624, 4
        %s626 = smul.addr %s625, 8
        %s627 = scalar_lea.vmem %s8, %s626
        %p628 = scmp.lt.s32.totalorder %s37, 1
        %s629 = scalar_select %p628, %s37, 1
        %s630 = scalar_lea.vmem %s9, %s629
        %p631 = scmp.lt.s32.totalorder %s37, 1
        %s632 = scalar_select %p631, %s37, 1
        %s633 = smul.addr %s632, 8
        %s634 = smul.addr %s633, 8
        %s635 = scalar_lea.vmem %s10, %s634
        %p636 = scmp.lt.s32.totalorder %s37, 1
        %s637 = scalar_select %p636, %s37, 1
        %s638 = scalar_lea.vmem %s11, %s637
        %p639 = scmp.eq.s32.totalorder %s37, 0
        // Predicated region
        $region77: #{tpu_custom_call.1} parent=67 // pred_check
          %p640 = pneg %p639
        $region78: #{tpu_custom_call.1} parent=67 // pred_check_branch
          %642 = sbr.rel (%p640) target = $region80
        $region79: #{tpu_custom_call.1} parent=67 // pred_region
          %v643 = vld [vmem:[%s510] sm:$0xff]
          %vm644 = vcmask 261120
          %645 = vst.msk [vmem:[#allocation2] sm:$0xff] %vm644, %v643
        $region80: #{tpu_custom_call.1} parent=67 // pred_fallthru
          _
        %v646 = vld [vmem:[#allocation2] sm:$0xff]
        %v647 = vld [vmem:[%s518] sm:$0x1]
        %v648 = vld [vmem:[%s603] sm:$0x1]
        %vm649 = vcmask 261120
        %v650 = vsel %vm649, %v646, 0.0
        %651 = vadd.xlane.f32.xlu0 %v650
        %v652 = vpop.xlane.xlu0 %651
        %v653 = vrcp.pop 32.0
        %v654 = vmul.f32 %v652, %v653
        %v655 = vsub.f32 %v646, %v654
        %v656 = vmul.f32 %v655, %v655
        %v657 = vsel %vm649, %v656, 0.0
        %658 = vadd.xlane.f32.xlu0 %v657
        %v659 = vpop.xlane.xlu0 %658
        %v660 = vmul.f32 %v659, %v653
        %v661 = vadd.f32 %v660, 1e-05
        %v662 = vrsqrt.pop %v661
        %v663 = vmul.f32 %v655, %v662
        %v665 = vlaneseq
        %v666 = vshrl.u32 %v665, 7
        %v667 = vsub.s32 0, %v666
        %v668 = vrot.slane %v647, %v667
        %v670 = vmul.f32 %v663, %v668
        %v672 = vlaneseq
        %v673 = vshrl.u32 %v672, 7
        %v674 = vsub.s32 0, %v673
        %v675 = vrot.slane %v648, %v674
        %v677 = vadd.f32 %v670, %v675
        %v678 = vld [vmem:[%s608] sm:$0xff]
        %v679 = vld [vmem:[%s608 + $0x8] sm:$0xff]
        %v680 = vld [vmem:[%s608 + $0x10] sm:$0xff]
        %v681 = vld [vmem:[%s608 + $0x18] sm:$0xff]
        %v683 = vsel %vm649, %v677, 0
        %685 = vmatprep.subr.mxu0 0.0
        %686 = vmatpush1.msra.mxu0 0.0
        %687 = vmatprep.subr.mxu0 0.0
        %688 = vmatpush1.msra.mxu0 0.0
        %689 = vmatprep.subr.mxu0 0.0
        %690 = vmatpush1.msra.mxu0 0.0
        %691 = vmatprep.subr.mxu0 0.0
        %692 = vmatpush1.msra.mxu0 0.0
        %693 = vmatprep.subr.mxu0 0.0
        %694 = vmatpush1.msra.mxu0 0.0
        %695 = vmatprep.subr.mxu0 0.0
        %696 = vmatpush1.msra.mxu0 0.0
        %697 = vmatprep.subr.mxu0 0.0
        %698 = vmatpush1.msra.mxu0 0.0
        %699 = vmatprep.subr.mxu0 0.0
        %700 = vmatpush1.msra.mxu0 0.0
        %701 = vmatprep.subr.mxu0 0.0
        %702 = vmatpush1.msra.mxu0 0.0
        %703 = vmatprep.subr.mxu0 0.0
        %704 = vmatpush1.msra.mxu0 0.0
        %705 = vmatprep.subr.mxu0 0.0
        %706 = vmatpush1.msra.mxu0 0.0
        %707 = vmatprep.subr.mxu0 0.0
        %708 = vmatpush1.msra.mxu0 0.0
        %709 = vmatprep.subr.mxu0 0.0
        %710 = vmatpush1.msra.mxu0 %v681
        %711 = vmatprep.subr.mxu0 0.0
        %712 = vmatpush1.msra.mxu0 %v680
        %713 = vmatprep.subr.mxu0 0.0
        %714 = vmatpush1.msra.mxu0 %v679
        %715 = vmatprep.subr.mxu0 0.0
        %716 = vmatpush1.msra.mxu0 %v678
        %717 = vmatprep.subr.mxu0 0.0
        %718 = vmatpush2.msra.mxu0 0.0
        %719 = vmatprep.subr.mxu0 0.0
        %720 = vmatpush2.msra.mxu0 0.0
        %721 = vmatprep.subr.mxu0 0.0
        %722 = vmatpush2.msra.mxu0 0.0
        %723 = vmatprep.subr.mxu0 0.0
        %724 = vmatpush2.msra.mxu0 0.0
        %725 = vmatprep.subr.mxu0 0.0
        %726 = vmatpush2.msra.mxu0 0.0
        %727 = vmatprep.subr.mxu0 0.0
        %728 = vmatpush2.msra.mxu0 0.0
        %729 = vmatprep.subr.mxu0 0.0
        %730 = vmatpush2.msra.mxu0 0.0
        %731 = vmatprep.subr.mxu0 0.0
        %732 = vmatpush2.msra.mxu0 0.0
        %733 = vmatprep.subr.mxu0 0.0
        %734 = vmatpush2.msra.mxu0 0.0
        %735 = vmatprep.subr.mxu0 0.0
        %736 = vmatpush2.msra.mxu0 0.0
        %737 = vmatprep.subr.mxu0 0.0
        %738 = vmatpush2.msra.mxu0 0.0
        %739 = vmatprep.subr.mxu0 0.0
        %740 = vmatpush2.msra.mxu0 0.0
        %741 = vmatprep.subr.mxu0 0.0
        %742 = vmatpush2.msra.mxu0 0.0
        %743 = vmatprep.subr.mxu0 0.0
        %744 = vmatpush2.msra.mxu0 0.0
        %745 = vmatprep.subr.mxu0 0.0
        %746 = vmatpush2.msra.mxu0 0.0
        %747 = vmatprep.subr.mxu0 0.0
        %748 = vmatpush2.msra.mxu0 0.0
        %749 = vmatprep.mubr.f32.mxu0 0.0
        %750 = vmatmul.mubr.f32.gmra.mxu0 %v683
        %v751 = vpop.f32.mrf.mxu0
        %v752 = vadd.f32 0.0, %v751
        %v753 = vpop.f32.mrf.mxu0
        %754 = vdwg.mxu0
        %756 = vrot.lane.b32.xlu0 %v752, 96
        %v757 = vpop.permute.xlu0 %756
        %vm758 = vcmask 64512
        %v759 = vsel %vm758, %v752, 0
        %v761 = vsel %vm758, %v757, 0
        %763 = vmatprep.subr.mxu0 0.0
        %764 = vmatpush1.xpose.msra.mxu0 0.0
        %765 = vmatprep.subr.mxu0 0.0
        %766 = vmatpush1.xpose.msra.mxu0 0.0
        %767 = vmatprep.subr.mxu0 0.0
        %768 = vmatpush1.xpose.msra.mxu0 0.0
        %769 = vmatprep.subr.mxu0 0.0
        %770 = vmatpush1.xpose.msra.mxu0 0.0
        %771 = vmatprep.subr.mxu0 0.0
        %772 = vmatpush1.xpose.msra.mxu0 0.0
        %773 = vmatprep.subr.mxu0 0.0
        %774 = vmatpush1.xpose.msra.mxu0 0.0
        %775 = vmatprep.subr.mxu0 0.0
        %776 = vmatpush1.xpose.msra.mxu0 0.0
        %777 = vmatprep.subr.mxu0 0.0
        %778 = vmatpush1.xpose.msra.mxu0 0.0
        %779 = vmatprep.subr.mxu0 0.0
        %780 = vmatpush1.xpose.msra.mxu0 0.0
        %781 = vmatprep.subr.mxu0 0.0
        %782 = vmatpush1.xpose.msra.mxu0 0.0
        %783 = vmatprep.subr.mxu0 0.0
        %784 = vmatpush1.xpose.msra.mxu0 0.0
        %785 = vmatprep.subr.mxu0 0.0
        %786 = vmatpush1.xpose.msra.mxu0 0.0
        %787 = vmatprep.subr.mxu0 0.0
        %788 = vmatpush1.xpose.msra.mxu0 0.0
        %789 = vmatprep.subr.mxu0 0.0
        %790 = vmatpush1.xpose.msra.mxu0 0.0
        %791 = vmatprep.subr.mxu0 0.0
        %792 = vmatpush1.xpose.msra.mxu0 0.0
        %793 = vmatprep.subr.mxu0 0.0
        %794 = vmatpush1.xpose.msra.mxu0 %v761
        %795 = vmatprep.subr.mxu0 0.0
        %796 = vmatpush2.xpose.msra.mxu0 0.0
        %797 = vmatprep.subr.mxu0 0.0
        %798 = vmatpush2.xpose.msra.mxu0 0.0
        %799 = vmatprep.subr.mxu0 0.0
        %800 = vmatpush2.xpose.msra.mxu0 0.0
        %801 = vmatprep.subr.mxu0 0.0
        %802 = vmatpush2.xpose.msra.mxu0 0.0
        %803 = vmatprep.subr.mxu0 0.0
        %804 = vmatpush2.xpose.msra.mxu0 0.0
        %805 = vmatprep.subr.mxu0 0.0
        %806 = vmatpush2.xpose.msra.mxu0 0.0
        %807 = vmatprep.subr.mxu0 0.0
        %808 = vmatpush2.xpose.msra.mxu0 0.0
        %809 = vmatprep.subr.mxu0 0.0
        %810 = vmatpush2.xpose.msra.mxu0 0.0
        %811 = vmatprep.subr.mxu0 0.0
        %812 = vmatpush2.xpose.msra.mxu0 0.0
        %813 = vmatprep.subr.mxu0 0.0
        %814 = vmatpush2.xpose.msra.mxu0 0.0
        %815 = vmatprep.subr.mxu0 0.0
        %816 = vmatpush2.xpose.msra.mxu0 0.0
        %817 = vmatprep.subr.mxu0 0.0
        %818 = vmatpush2.xpose.msra.mxu0 0.0
        %819 = vmatprep.subr.mxu0 0.0
        %820 = vmatpush2.xpose.msra.mxu0 0.0
        %821 = vmatprep.subr.mxu0 0.0
        %822 = vmatpush2.xpose.msra.mxu0 0.0
        %823 = vmatprep.subr.mxu0 0.0
        %824 = vmatpush2.xpose.msra.mxu0 0.0
        %825 = vmatprep.subr.mxu0 0.0
        %826 = vmatpush2.xpose.msra.mxu0 0.0
        %827 = vmatprep.mubr.f32.mxu0 0.0
        %828 = vmatmul.mubr.f32.gmra.mxu0 %v759
        %v829 = vpop.f32.mrf.mxu0
        %v830 = vadd.f32 0.0, %v829
        %v831 = vpop.f32.mrf.mxu0
        %832 = vdwg.mxu0
        %v833 = vsel %vm758, %v830, -inf
        %834 = vmax.xlane.f32.xlu0 %v833
        %v835 = vpop.xlane.xlu0 %834
        %v836 = vsub.f32 %v830, %v835
        %v837 = vmul.f32 %v836, 1.442695
        %v838 = vpow.pop %v837
        %v839 = vsel %vm758, %v838, 0.0
        %840 = vadd.xlane.f32.xlu0 %v839
        %v841 = vpop.xlane.xlu0 %840
        %v842 = vrcp.pop %v841
        %v843 = vmul.f32 %v838, %v842
        %844 = vrot.lane.b32.xlu0 %v752, 64
        %v845 = vpop.permute.xlu0 %844
        %v848 = vsel %vm758, %v843, 0
        %850 = vmatprep.subr.mxu0 0.0
        %851 = vmatpush1.msra.mxu0 0.0
        %852 = vmatprep.subr.mxu0 0.0
        %853 = vmatpush1.msra.mxu0 0.0
        %854 = vmatprep.subr.mxu0 0.0
        %855 = vmatpush1.msra.mxu0 0.0
        %856 = vmatprep.subr.mxu0 0.0
        %857 = vmatpush1.msra.mxu0 0.0
        %858 = vmatprep.subr.mxu0 0.0
        %859 = vmatpush1.msra.mxu0 0.0
        %860 = vmatprep.subr.mxu0 0.0
        %861 = vmatpush1.msra.mxu0 0.0
        %862 = vmatprep.subr.mxu0 0.0
        %863 = vmatpush1.msra.mxu0 0.0
        %864 = vmatprep.subr.mxu0 0.0
        %865 = vmatpush1.msra.mxu0 0.0
        %866 = vmatprep.subr.mxu0 0.0
        %867 = vmatpush1.msra.mxu0 0.0
        %868 = vmatprep.subr.mxu0 0.0
        %869 = vmatpush1.msra.mxu0 0.0
        %870 = vmatprep.subr.mxu0 0.0
        %871 = vmatpush1.msra.mxu0 0.0
        %872 = vmatprep.subr.mxu0 0.0
        %873 = vmatpush1.msra.mxu0 0.0
        %874 = vmatprep.subr.mxu0 0.0
        %875 = vmatpush1.msra.mxu0 0.0
        %876 = vmatprep.subr.mxu0 0.0
        %877 = vmatpush1.msra.mxu0 0.0
        %878 = vmatprep.subr.mxu0 0.0
        %879 = vmatpush1.msra.mxu0 0.0
        %880 = vmatprep.subr.mxu0 0.0
        %881 = vmatpush1.msra.mxu0 %v845
        %882 = vmatprep.subr.mxu0 0.0
        %883 = vmatpush2.msra.mxu0 0.0
        %884 = vmatprep.subr.mxu0 0.0
        %885 = vmatpush2.msra.mxu0 0.0
        %886 = vmatprep.subr.mxu0 0.0
        %887 = vmatpush2.msra.mxu0 0.0
        %888 = vmatprep.subr.mxu0 0.0
        %889 = vmatpush2.msra.mxu0 0.0
        %890 = vmatprep.subr.mxu0 0.0
        %891 = vmatpush2.msra.mxu0 0.0
        %892 = vmatprep.subr.mxu0 0.0
        %893 = vmatpush2.msra.mxu0 0.0
        %894 = vmatprep.subr.mxu0 0.0
        %895 = vmatpush2.msra.mxu0 0.0
        %896 = vmatprep.subr.mxu0 0.0
        %897 = vmatpush2.msra.mxu0 0.0
        %898 = vmatprep.subr.mxu0 0.0
        %899 = vmatpush2.msra.mxu0 0.0
        %900 = vmatprep.subr.mxu0 0.0
        %901 = vmatpush2.msra.mxu0 0.0
        %902 = vmatprep.subr.mxu0 0.0
        %903 = vmatpush2.msra.mxu0 0.0
        %904 = vmatprep.subr.mxu0 0.0
        %905 = vmatpush2.msra.mxu0 0.0
        %906 = vmatprep.subr.mxu0 0.0
        %907 = vmatpush2.msra.mxu0 0.0
        %908 = vmatprep.subr.mxu0 0.0
        %909 = vmatpush2.msra.mxu0 0.0
        %910 = vmatprep.subr.mxu0 0.0
        %911 = vmatpush2.msra.mxu0 0.0
        %912 = vmatprep.subr.mxu0 0.0
        %913 = vmatpush2.msra.mxu0 0.0
        %914 = vmatprep.mubr.f32.mxu0 0.0
        %915 = vmatmul.mubr.f32.gmra.mxu0 %v848
        %v916 = vpop.f32.mrf.mxu0
        %v917 = vadd.f32 0.0, %v916
        %v918 = vpop.f32.mrf.mxu0
        %919 = vdwg.mxu0
        %920 = vrot.lane.b32.xlu0 %v752, 120
        %v921 = vpop.permute.xlu0 %920
        %922 = vrot.lane.b32.xlu0 %v752, 88
        %v923 = vpop.permute.xlu0 %922
        %v924 = vsel %vm758, %v921, 0
        %v926 = vsel %vm758, %v923, 0
        %928 = vmatprep.subr.mxu0 0.0
        %929 = vmatpush1.xpose.msra.mxu0 0.0
        %930 = vmatprep.subr.mxu0 0.0
        %931 = vmatpush1.xpose.msra.mxu0 0.0
        %932 = vmatprep.subr.mxu0 0.0
        %933 = vmatpush1.xpose.msra.mxu0 0.0
        %934 = vmatprep.subr.mxu0 0.0
        %935 = vmatpush1.xpose.msra.mxu0 0.0
        %936 = vmatprep.subr.mxu0 0.0
        %937 = vmatpush1.xpose.msra.mxu0 0.0
        %938 = vmatprep.subr.mxu0 0.0
        %939 = vmatpush1.xpose.msra.mxu0 0.0
        %940 = vmatprep.subr.mxu0 0.0
        %941 = vmatpush1.xpose.msra.mxu0 0.0
        %942 = vmatprep.subr.mxu0 0.0
        %943 = vmatpush1.xpose.msra.mxu0 0.0
        %944 = vmatprep.subr.mxu0 0.0
        %945 = vmatpush1.xpose.msra.mxu0 0.0
        %946 = vmatprep.subr.mxu0 0.0
        %947 = vmatpush1.xpose.msra.mxu0 0.0
        %948 = vmatprep.subr.mxu0 0.0
        %949 = vmatpush1.xpose.msra.mxu0 0.0
        %950 = vmatprep.subr.mxu0 0.0
        %951 = vmatpush1.xpose.msra.mxu0 0.0
        %952 = vmatprep.subr.mxu0 0.0
        %953 = vmatpush1.xpose.msra.mxu0 0.0
        %954 = vmatprep.subr.mxu0 0.0
        %955 = vmatpush1.xpose.msra.mxu0 0.0
        %956 = vmatprep.subr.mxu0 0.0
        %957 = vmatpush1.xpose.msra.mxu0 0.0
        %958 = vmatprep.subr.mxu0 0.0
        %959 = vmatpush1.xpose.msra.mxu0 %v926
        %960 = vmatprep.subr.mxu0 0.0
        %961 = vmatpush2.xpose.msra.mxu0 0.0
        %962 = vmatprep.subr.mxu0 0.0
        %963 = vmatpush2.xpose.msra.mxu0 0.0
        %964 = vmatprep.subr.mxu0 0.0
        %965 = vmatpush2.xpose.msra.mxu0 0.0
        %966 = vmatprep.subr.mxu0 0.0
        %967 = vmatpush2.xpose.msra.mxu0 0.0
        %968 = vmatprep.subr.mxu0 0.0
        %969 = vmatpush2.xpose.msra.mxu0 0.0
        %970 = vmatprep.subr.mxu0 0.0
        %971 = vmatpush2.xpose.msra.mxu0 0.0
        %972 = vmatprep.subr.mxu0 0.0
        %973 = vmatpush2.xpose.msra.mxu0 0.0
        %974 = vmatprep.subr.mxu0 0.0
        %975 = vmatpush2.xpose.msra.mxu0 0.0
        %976 = vmatprep.subr.mxu0 0.0
        %977 = vmatpush2.xpose.msra.mxu0 0.0
        %978 = vmatprep.subr.mxu0 0.0
        %979 = vmatpush2.xpose.msra.mxu0 0.0
        %980 = vmatprep.subr.mxu0 0.0
        %981 = vmatpush2.xpose.msra.mxu0 0.0
        %982 = vmatprep.subr.mxu0 0.0
        %983 = vmatpush2.xpose.msra.mxu0 0.0
        %984 = vmatprep.subr.mxu0 0.0
        %985 = vmatpush2.xpose.msra.mxu0 0.0
        %986 = vmatprep.subr.mxu0 0.0
        %987 = vmatpush2.xpose.msra.mxu0 0.0
        %988 = vmatprep.subr.mxu0 0.0
        %989 = vmatpush2.xpose.msra.mxu0 0.0
        %990 = vmatprep.subr.mxu0 0.0
        %991 = vmatpush2.xpose.msra.mxu0 0.0
        %992 = vmatprep.mubr.f32.mxu0 0.0
        %993 = vmatmul.mubr.f32.gmra.mxu0 %v924
        %v994 = vpop.f32.mrf.mxu0
        %v995 = vadd.f32 0.0, %v994
        %v996 = vpop.f32.mrf.mxu0
        %997 = vdwg.mxu0
        %v998 = vsel %vm758, %v995, -inf
        %999 = vmax.xlane.f32.xlu0 %v998
        %v1000 = vpop.xlane.xlu0 %999
        %v1001 = vsub.f32 %v995, %v1000
        %v1002 = vmul.f32 %v1001, 1.442695
        %v1003 = vpow.pop %v1002
        %v1004 = vsel %vm758, %v1003, 0.0
        %1005 = vadd.xlane.f32.xlu0 %v1004
        %v1006 = vpop.xlane.xlu0 %1005
        %v1007 = vrcp.pop %v1006
        %v1008 = vmul.f32 %v1003, %v1007
        %1009 = vrot.lane.b32.xlu0 %v752, 56
        %v1010 = vpop.permute.xlu0 %1009
        %v1013 = vsel %vm758, %v1008, 0
        %1015 = vmatprep.subr.mxu0 0.0
        %1016 = vmatpush1.msra.mxu0 0.0
        %1017 = vmatprep.subr.mxu0 0.0
        %1018 = vmatpush1.msra.mxu0 0.0
        %1019 = vmatprep.subr.mxu0 0.0
        %1020 = vmatpush1.msra.mxu0 0.0
        %1021 = vmatprep.subr.mxu0 0.0
        %1022 = vmatpush1.msra.mxu0 0.0
        %1023 = vmatprep.subr.mxu0 0.0
        %1024 = vmatpush1.msra.mxu0 0.0
        %1025 = vmatprep.subr.mxu0 0.0
        %1026 = vmatpush1.msra.mxu0 0.0
        %1027 = vmatprep.subr.mxu0 0.0
        %1028 = vmatpush1.msra.mxu0 0.0
        %1029 = vmatprep.subr.mxu0 0.0
        %1030 = vmatpush1.msra.mxu0 0.0
        %1031 = vmatprep.subr.mxu0 0.0
        %1032 = vmatpush1.msra.mxu0 0.0
        %1033 = vmatprep.subr.mxu0 0.0
        %1034 = vmatpush1.msra.mxu0 0.0
        %1035 = vmatprep.subr.mxu0 0.0
        %1036 = vmatpush1.msra.mxu0 0.0
        %1037 = vmatprep.subr.mxu0 0.0
        %1038 = vmatpush1.msra.mxu0 0.0
        %1039 = vmatprep.subr.mxu0 0.0
        %1040 = vmatpush1.msra.mxu0 0.0
        %1041 = vmatprep.subr.mxu0 0.0
        %1042 = vmatpush1.msra.mxu0 0.0
        %1043 = vmatprep.subr.mxu0 0.0
        %1044 = vmatpush1.msra.mxu0 0.0
        %1045 = vmatprep.subr.mxu0 0.0
        %1046 = vmatpush1.msra.mxu0 %v1010
        %1047 = vmatprep.subr.mxu0 0.0
        %1048 = vmatpush2.msra.mxu0 0.0
        %1049 = vmatprep.subr.mxu0 0.0
        %1050 = vmatpush2.msra.mxu0 0.0
        %1051 = vmatprep.subr.mxu0 0.0
        %1052 = vmatpush2.msra.mxu0 0.0
        %1053 = vmatprep.subr.mxu0 0.0
        %1054 = vmatpush2.msra.mxu0 0.0
        %1055 = vmatprep.subr.mxu0 0.0
        %1056 = vmatpush2.msra.mxu0 0.0
        %1057 = vmatprep.subr.mxu0 0.0
        %1058 = vmatpush2.msra.mxu0 0.0
        %1059 = vmatprep.subr.mxu0 0.0
        %1060 = vmatpush2.msra.mxu0 0.0
        %1061 = vmatprep.subr.mxu0 0.0
        %1062 = vmatpush2.msra.mxu0 0.0
        %1063 = vmatprep.subr.mxu0 0.0
        %1064 = vmatpush2.msra.mxu0 0.0
        %1065 = vmatprep.subr.mxu0 0.0
        %1066 = vmatpush2.msra.mxu0 0.0
        %1067 = vmatprep.subr.mxu0 0.0
        %1068 = vmatpush2.msra.mxu0 0.0
        %1069 = vmatprep.subr.mxu0 0.0
        %1070 = vmatpush2.msra.mxu0 0.0
        %1071 = vmatprep.subr.mxu0 0.0
        %1072 = vmatpush2.msra.mxu0 0.0
        %1073 = vmatprep.subr.mxu0 0.0
        %1074 = vmatpush2.msra.mxu0 0.0
        %1075 = vmatprep.subr.mxu0 0.0
        %1076 = vmatpush2.msra.mxu0 0.0
        %1077 = vmatprep.subr.mxu0 0.0
        %1078 = vmatpush2.msra.mxu0 0.0
        %1079 = vmatprep.mubr.f32.mxu0 0.0
        %1080 = vmatmul.mubr.f32.gmra.mxu0 %v1013
        %v1081 = vpop.f32.mrf.mxu0
        %v1082 = vadd.f32 0.0, %v1081
        %v1083 = vpop.f32.mrf.mxu0
        %1084 = vdwg.mxu0
        %1085 = vrot.lane.b32.xlu0 %v752, 112
        %v1086 = vpop.permute.xlu0 %1085
        %1087 = vrot.lane.b32.xlu0 %v752, 80
        %v1088 = vpop.permute.xlu0 %1087
        %v1089 = vsel %vm758, %v1086, 0
        %v1091 = vsel %vm758, %v1088, 0
        %1093 = vmatprep.subr.mxu0 0.0
        %1094 = vmatpush1.xpose.msra.mxu0 0.0
        %1095 = vmatprep.subr.mxu0 0.0
        %1096 = vmatpush1.xpose.msra.mxu0 0.0
        %1097 = vmatprep.subr.mxu0 0.0
        %1098 = vmatpush1.xpose.msra.mxu0 0.0
        %1099 = vmatprep.subr.mxu0 0.0
        %1100 = vmatpush1.xpose.msra.mxu0 0.0
        %1101 = vmatprep.subr.mxu0 0.0
        %1102 = vmatpush1.xpose.msra.mxu0 0.0
        %1103 = vmatprep.subr.mxu0 0.0
        %1104 = vmatpush1.xpose.msra.mxu0 0.0
        %1105 = vmatprep.subr.mxu0 0.0
        %1106 = vmatpush1.xpose.msra.mxu0 0.0
        %1107 = vmatprep.subr.mxu0 0.0
        %1108 = vmatpush1.xpose.msra.mxu0 0.0
        %1109 = vmatprep.subr.mxu0 0.0
        %1110 = vmatpush1.xpose.msra.mxu0 0.0
        %1111 = vmatprep.subr.mxu0 0.0
        %1112 = vmatpush1.xpose.msra.mxu0 0.0
        %1113 = vmatprep.subr.mxu0 0.0
        %1114 = vmatpush1.xpose.msra.mxu0 0.0
        %1115 = vmatprep.subr.mxu0 0.0
        %1116 = vmatpush1.xpose.msra.mxu0 0.0
        %1117 = vmatprep.subr.mxu0 0.0
        %1118 = vmatpush1.xpose.msra.mxu0 0.0
        %1119 = vmatprep.subr.mxu0 0.0
        %1120 = vmatpush1.xpose.msra.mxu0 0.0
        %1121 = vmatprep.subr.mxu0 0.0
        %1122 = vmatpush1.xpose.msra.mxu0 0.0
        %1123 = vmatprep.subr.mxu0 0.0
        %1124 = vmatpush1.xpose.msra.mxu0 %v1091
        %1125 = vmatprep.subr.mxu0 0.0
        %1126 = vmatpush2.xpose.msra.mxu0 0.0
        %1127 = vmatprep.subr.mxu0 0.0
        %1128 = vmatpush2.xpose.msra.mxu0 0.0
        %1129 = vmatprep.subr.mxu0 0.0
        %1130 = vmatpush2.xpose.msra.mxu0 0.0
        %1131 = vmatprep.subr.mxu0 0.0
        %1132 = vmatpush2.xpose.msra.mxu0 0.0
        %1133 = vmatprep.subr.mxu0 0.0
        %1134 = vmatpush2.xpose.msra.mxu0 0.0
        %1135 = vmatprep.subr.mxu0 0.0
        %1136 = vmatpush2.xpose.msra.mxu0 0.0
        %1137 = vmatprep.subr.mxu0 0.0
        %1138 = vmatpush2.xpose.msra.mxu0 0.0
        %1139 = vmatprep.subr.mxu0 0.0
        %1140 = vmatpush2.xpose.msra.mxu0 0.0
        %1141 = vmatprep.subr.mxu0 0.0
        %1142 = vmatpush2.xpose.msra.mxu0 0.0
        %1143 = vmatprep.subr.mxu0 0.0
        %1144 = vmatpush2.xpose.msra.mxu0 0.0
        %1145 = vmatprep.subr.mxu0 0.0
        %1146 = vmatpush2.xpose.msra.mxu0 0.0
        %1147 = vmatprep.subr.mxu0 0.0
        %1148 = vmatpush2.xpose.msra.mxu0 0.0
        %1149 = vmatprep.subr.mxu0 0.0
        %1150 = vmatpush2.xpose.msra.mxu0 0.0
        %1151 = vmatprep.subr.mxu0 0.0
        %1152 = vmatpush2.xpose.msra.mxu0 0.0
        %1153 = vmatprep.subr.mxu0 0.0
        %1154 = vmatpush2.xpose.msra.mxu0 0.0
        %1155 = vmatprep.subr.mxu0 0.0
        %1156 = vmatpush2.xpose.msra.mxu0 0.0
        %1157 = vmatprep.mubr.f32.mxu0 0.0
        %1158 = vmatmul.mubr.f32.gmra.mxu0 %v1089
        %v1159 = vpop.f32.mrf.mxu0
        %v1160 = vadd.f32 0.0, %v1159
        %v1161 = vpop.f32.mrf.mxu0
        %1162 = vdwg.mxu0
        %v1163 = vsel %vm758, %v1160, -inf
        %1164 = vmax.xlane.f32.xlu0 %v1163
        %v1165 = vpop.xlane.xlu0 %1164
        %v1166 = vsub.f32 %v1160, %v1165
        %v1167 = vmul.f32 %v1166, 1.442695
        %v1168 = vpow.pop %v1167
        %v1169 = vsel %vm758, %v1168, 0.0
        %1170 = vadd.xlane.f32.xlu0 %v1169
        %v1171 = vpop.xlane.xlu0 %1170
        %v1172 = vrcp.pop %v1171
        %v1173 = vmul.f32 %v1168, %v1172
        %1174 = vrot.lane.b32.xlu0 %v752, 48
        %v1175 = vpop.permute.xlu0 %1174
        %v1178 = vsel %vm758, %v1173, 0
        %1180 = vmatprep.subr.mxu0 0.0
        %1181 = vmatpush1.msra.mxu0 0.0
        %1182 = vmatprep.subr.mxu0 0.0
        %1183 = vmatpush1.msra.mxu0 0.0
        %1184 = vmatprep.subr.mxu0 0.0
        %1185 = vmatpush1.msra.mxu0 0.0
        %1186 = vmatprep.subr.mxu0 0.0
        %1187 = vmatpush1.msra.mxu0 0.0
        %1188 = vmatprep.subr.mxu0 0.0
        %1189 = vmatpush1.msra.mxu0 0.0
        %1190 = vmatprep.subr.mxu0 0.0
        %1191 = vmatpush1.msra.mxu0 0.0
        %1192 = vmatprep.subr.mxu0 0.0
        %1193 = vmatpush1.msra.mxu0 0.0
        %1194 = vmatprep.subr.mxu0 0.0
        %1195 = vmatpush1.msra.mxu0 0.0
        %1196 = vmatprep.subr.mxu0 0.0
        %1197 = vmatpush1.msra.mxu0 0.0
        %1198 = vmatprep.subr.mxu0 0.0
        %1199 = vmatpush1.msra.mxu0 0.0
        %1200 = vmatprep.subr.mxu0 0.0
        %1201 = vmatpush1.msra.mxu0 0.0
        %1202 = vmatprep.subr.mxu0 0.0
        %1203 = vmatpush1.msra.mxu0 0.0
        %1204 = vmatprep.subr.mxu0 0.0
        %1205 = vmatpush1.msra.mxu0 0.0
        %1206 = vmatprep.subr.mxu0 0.0
        %1207 = vmatpush1.msra.mxu0 0.0
        %1208 = vmatprep.subr.mxu0 0.0
        %1209 = vmatpush1.msra.mxu0 0.0
        %1210 = vmatprep.subr.mxu0 0.0
        %1211 = vmatpush1.msra.mxu0 %v1175
        %1212 = vmatprep.subr.mxu0 0.0
        %1213 = vmatpush2.msra.mxu0 0.0
        %1214 = vmatprep.subr.mxu0 0.0
        %1215 = vmatpush2.msra.mxu0 0.0
        %1216 = vmatprep.subr.mxu0 0.0
        %1217 = vmatpush2.msra.mxu0 0.0
        %1218 = vmatprep.subr.mxu0 0.0
        %1219 = vmatpush2.msra.mxu0 0.0
        %1220 = vmatprep.subr.mxu0 0.0
        %1221 = vmatpush2.msra.mxu0 0.0
        %1222 = vmatprep.subr.mxu0 0.0
        %1223 = vmatpush2.msra.mxu0 0.0
        %1224 = vmatprep.subr.mxu0 0.0
        %1225 = vmatpush2.msra.mxu0 0.0
        %1226 = vmatprep.subr.mxu0 0.0
        %1227 = vmatpush2.msra.mxu0 0.0
        %1228 = vmatprep.subr.mxu0 0.0
        %1229 = vmatpush2.msra.mxu0 0.0
        %1230 = vmatprep.subr.mxu0 0.0
        %1231 = vmatpush2.msra.mxu0 0.0
        %1232 = vmatprep.subr.mxu0 0.0
        %1233 = vmatpush2.msra.mxu0 0.0
        %1234 = vmatprep.subr.mxu0 0.0
        %1235 = vmatpush2.msra.mxu0 0.0
        %1236 = vmatprep.subr.mxu0 0.0
        %1237 = vmatpush2.msra.mxu0 0.0
        %1238 = vmatprep.subr.mxu0 0.0
        %1239 = vmatpush2.msra.mxu0 0.0
        %1240 = vmatprep.subr.mxu0 0.0
        %1241 = vmatpush2.msra.mxu0 0.0
        %1242 = vmatprep.subr.mxu0 0.0
        %1243 = vmatpush2.msra.mxu0 0.0
        %1244 = vmatprep.mubr.f32.mxu0 0.0
        %1245 = vmatmul.mubr.f32.gmra.mxu0 %v1178
        %v1246 = vpop.f32.mrf.mxu0
        %v1247 = vadd.f32 0.0, %v1246
        %v1248 = vpop.f32.mrf.mxu0
        %1249 = vdwg.mxu0
        %1250 = vrot.lane.b32.xlu0 %v752, 104
        %v1251 = vpop.permute.xlu0 %1250
        %1252 = vrot.lane.b32.xlu0 %v752, 72
        %v1253 = vpop.permute.xlu0 %1252
        %v1254 = vsel %vm758, %v1251, 0
        %v1256 = vsel %vm758, %v1253, 0
        %1258 = vmatprep.subr.mxu0 0.0
        %1259 = vmatpush1.xpose.msra.mxu0 0.0
        %1260 = vmatprep.subr.mxu0 0.0
        %1261 = vmatpush1.xpose.msra.mxu0 0.0
        %1262 = vmatprep.subr.mxu0 0.0
        %1263 = vmatpush1.xpose.msra.mxu0 0.0
        %1264 = vmatprep.subr.mxu0 0.0
        %1265 = vmatpush1.xpose.msra.mxu0 0.0
        %1266 = vmatprep.subr.mxu0 0.0
        %1267 = vmatpush1.xpose.msra.mxu0 0.0
        %1268 = vmatprep.subr.mxu0 0.0
        %1269 = vmatpush1.xpose.msra.mxu0 0.0
        %1270 = vmatprep.subr.mxu0 0.0
        %1271 = vmatpush1.xpose.msra.mxu0 0.0
        %1272 = vmatprep.subr.mxu0 0.0
        %1273 = vmatpush1.xpose.msra.mxu0 0.0
        %1274 = vmatprep.subr.mxu0 0.0
        %1275 = vmatpush1.xpose.msra.mxu0 0.0
        %1276 = vmatprep.subr.mxu0 0.0
        %1277 = vmatpush1.xpose.msra.mxu0 0.0
        %1278 = vmatprep.subr.mxu0 0.0
        %1279 = vmatpush1.xpose.msra.mxu0 0.0
        %1280 = vmatprep.subr.mxu0 0.0
        %1281 = vmatpush1.xpose.msra.mxu0 0.0
        %1282 = vmatprep.subr.mxu0 0.0
        %1283 = vmatpush1.xpose.msra.mxu0 0.0
        %1284 = vmatprep.subr.mxu0 0.0
        %1285 = vmatpush1.xpose.msra.mxu0 0.0
        %1286 = vmatprep.subr.mxu0 0.0
        %1287 = vmatpush1.xpose.msra.mxu0 0.0
        %1288 = vmatprep.subr.mxu0 0.0
        %1289 = vmatpush1.xpose.msra.mxu0 %v1256
        %1290 = vmatprep.subr.mxu0 0.0
        %1291 = vmatpush2.xpose.msra.mxu0 0.0
        %1292 = vmatprep.subr.mxu0 0.0
        %1293 = vmatpush2.xpose.msra.mxu0 0.0
        %1294 = vmatprep.subr.mxu0 0.0
        %1295 = vmatpush2.xpose.msra.mxu0 0.0
        %1296 = vmatprep.subr.mxu0 0.0
        %1297 = vmatpush2.xpose.msra.mxu0 0.0
        %1298 = vmatprep.subr.mxu0 0.0
        %1299 = vmatpush2.xpose.msra.mxu0 0.0
        %1300 = vmatprep.subr.mxu0 0.0
        %1301 = vmatpush2.xpose.msra.mxu0 0.0
        %1302 = vmatprep.subr.mxu0 0.0
        %1303 = vmatpush2.xpose.msra.mxu0 0.0
        %1304 = vmatprep.subr.mxu0 0.0
        %1305 = vmatpush2.xpose.msra.mxu0 0.0
        %1306 = vmatprep.subr.mxu0 0.0
        %1307 = vmatpush2.xpose.msra.mxu0 0.0
        %1308 = vmatprep.subr.mxu0 0.0
        %1309 = vmatpush2.xpose.msra.mxu0 0.0
        %1310 = vmatprep.subr.mxu0 0.0
        %1311 = vmatpush2.xpose.msra.mxu0 0.0
        %1312 = vmatprep.subr.mxu0 0.0
        %1313 = vmatpush2.xpose.msra.mxu0 0.0
        %1314 = vmatprep.subr.mxu0 0.0
        %1315 = vmatpush2.xpose.msra.mxu0 0.0
        %1316 = vmatprep.subr.mxu0 0.0
        %1317 = vmatpush2.xpose.msra.mxu0 0.0
        %1318 = vmatprep.subr.mxu0 0.0
        %1319 = vmatpush2.xpose.msra.mxu0 0.0
        %1320 = vmatprep.subr.mxu0 0.0
        %1321 = vmatpush2.xpose.msra.mxu0 0.0
        %1322 = vmatprep.mubr.f32.mxu0 0.0
        %1323 = vmatmul.mubr.f32.gmra.mxu0 %v1254
        %v1324 = vpop.f32.mrf.mxu0
        %v1325 = vadd.f32 0.0, %v1324
        %v1326 = vpop.f32.mrf.mxu0
        %1327 = vdwg.mxu0
        %v1328 = vsel %vm758, %v1325, -inf
        %1329 = vmax.xlane.f32.xlu0 %v1328
        %v1330 = vpop.xlane.xlu0 %1329
        %v1331 = vsub.f32 %v1325, %v1330
        %v1332 = vmul.f32 %v1331, 1.442695
        %v1333 = vpow.pop %v1332
        %v1334 = vsel %vm758, %v1333, 0.0
        %1335 = vadd.xlane.f32.xlu0 %v1334
        %v1336 = vpop.xlane.xlu0 %1335
        %v1337 = vrcp.pop %v1336
        %v1338 = vmul.f32 %v1333, %v1337
        %1339 = vrot.lane.b32.xlu0 %v752, 40
        %v1340 = vpop.permute.xlu0 %1339
        %v1343 = vsel %vm758, %v1338, 0
        %1345 = vmatprep.subr.mxu0 0.0
        %1346 = vmatpush1.msra.mxu0 0.0
        %1347 = vmatprep.subr.mxu0 0.0
        %1348 = vmatpush1.msra.mxu0 0.0
        %1349 = vmatprep.subr.mxu0 0.0
        %1350 = vmatpush1.msra.mxu0 0.0
        %1351 = vmatprep.subr.mxu0 0.0
        %1352 = vmatpush1.msra.mxu0 0.0
        %1353 = vmatprep.subr.mxu0 0.0
        %1354 = vmatpush1.msra.mxu0 0.0
        %1355 = vmatprep.subr.mxu0 0.0
        %1356 = vmatpush1.msra.mxu0 0.0
        %1357 = vmatprep.subr.mxu0 0.0
        %1358 = vmatpush1.msra.mxu0 0.0
        %1359 = vmatprep.subr.mxu0 0.0
        %1360 = vmatpush1.msra.mxu0 0.0
        %1361 = vmatprep.subr.mxu0 0.0
        %1362 = vmatpush1.msra.mxu0 0.0
        %1363 = vmatprep.subr.mxu0 0.0
        %1364 = vmatpush1.msra.mxu0 0.0
        %1365 = vmatprep.subr.mxu0 0.0
        %1366 = vmatpush1.msra.mxu0 0.0
        %1367 = vmatprep.subr.mxu0 0.0
        %1368 = vmatpush1.msra.mxu0 0.0
        %1369 = vmatprep.subr.mxu0 0.0
        %1370 = vmatpush1.msra.mxu0 0.0
        %1371 = vmatprep.subr.mxu0 0.0
        %1372 = vmatpush1.msra.mxu0 0.0
        %1373 = vmatprep.subr.mxu0 0.0
        %1374 = vmatpush1.msra.mxu0 0.0
        %1375 = vmatprep.subr.mxu0 0.0
        %1376 = vmatpush1.msra.mxu0 %v1340
        %1377 = vmatprep.subr.mxu0 0.0
        %1378 = vmatpush2.msra.mxu0 0.0
        %1379 = vmatprep.subr.mxu0 0.0
        %1380 = vmatpush2.msra.mxu0 0.0
        %1381 = vmatprep.subr.mxu0 0.0
        %1382 = vmatpush2.msra.mxu0 0.0
        %1383 = vmatprep.subr.mxu0 0.0
        %1384 = vmatpush2.msra.mxu0 0.0
        %1385 = vmatprep.subr.mxu0 0.0
        %1386 = vmatpush2.msra.mxu0 0.0
        %1387 = vmatprep.subr.mxu0 0.0
        %1388 = vmatpush2.msra.mxu0 0.0
        %1389 = vmatprep.subr.mxu0 0.0
        %1390 = vmatpush2.msra.mxu0 0.0
        %1391 = vmatprep.subr.mxu0 0.0
        %1392 = vmatpush2.msra.mxu0 0.0
        %1393 = vmatprep.subr.mxu0 0.0
        %1394 = vmatpush2.msra.mxu0 0.0
        %1395 = vmatprep.subr.mxu0 0.0
        %1396 = vmatpush2.msra.mxu0 0.0
        %1397 = vmatprep.subr.mxu0 0.0
        %1398 = vmatpush2.msra.mxu0 0.0
        %1399 = vmatprep.subr.mxu0 0.0
        %1400 = vmatpush2.msra.mxu0 0.0
        %1401 = vmatprep.subr.mxu0 0.0
        %1402 = vmatpush2.msra.mxu0 0.0
        %1403 = vmatprep.subr.mxu0 0.0
        %1404 = vmatpush2.msra.mxu0 0.0
        %1405 = vmatprep.subr.mxu0 0.0
        %1406 = vmatpush2.msra.mxu0 0.0
        %1407 = vmatprep.subr.mxu0 0.0
        %1408 = vmatpush2.msra.mxu0 0.0
        %1409 = vmatprep.mubr.f32.mxu0 0.0
        %1410 = vmatmul.mubr.f32.gmra.mxu0 %v1343
        %v1411 = vpop.f32.mrf.mxu0
        %v1412 = vadd.f32 0.0, %v1411
        %v1413 = vpop.f32.mrf.mxu0
        %1414 = vdwg.mxu0
        %1416 = vrot.lane.b32.xlu0 %v1082, 8
        %v1417 = vpop.permute.xlu0 %1416
        %1420 = vrot.lane.b32.xlu0 %v1247, 16
        %v1421 = vpop.permute.xlu0 %1420
        %1424 = vrot.lane.b32.xlu0 %v1412, 24
        %v1425 = vpop.permute.xlu0 %1424
        %v1427 = vsel %vm758, %v917, %v1417
        %vm1428 = vcmask 130048
        %v1429 = vsel %vm1428, %v1427, %v1421
        %vm1430 = vcmask 195584
        %v1431 = vsel %vm1430, %v1429, %v1425
        %v1432 = vld [vmem:[%s613] sm:$0xff]
        %v1433 = vld [vmem:[%s613 + $0x8] sm:$0xff]
        %v1434 = vld [vmem:[%s613 + $0x10] sm:$0xff]
        %v1435 = vld [vmem:[%s613 + $0x18] sm:$0xff]
        %v1436 = vld [vmem:[%s616] sm:$0x1]
        %v1438 = vlaneseq
        %v1439 = vshrl.u32 %v1438, 7
        %v1440 = vsub.s32 0, %v1439
        %v1441 = vrot.slane %v1436, %v1440
        %v1444 = vsel %vm649, %v1431, 0
        %1446 = vmatprep.subr.mxu0 0.0
        %1447 = vmatpush1.msra.mxu0 0.0
        %1448 = vmatprep.subr.mxu0 0.0
        %1449 = vmatpush1.msra.mxu0 0.0
        %1450 = vmatprep.subr.mxu0 0.0
        %1451 = vmatpush1.msra.mxu0 0.0
        %1452 = vmatprep.subr.mxu0 0.0
        %1453 = vmatpush1.msra.mxu0 0.0
        %1454 = vmatprep.subr.mxu0 0.0
        %1455 = vmatpush1.msra.mxu0 0.0
        %1456 = vmatprep.subr.mxu0 0.0
        %1457 = vmatpush1.msra.mxu0 0.0
        %1458 = vmatprep.subr.mxu0 0.0
        %1459 = vmatpush1.msra.mxu0 0.0
        %1460 = vmatprep.subr.mxu0 0.0
        %1461 = vmatpush1.msra.mxu0 0.0
        %1462 = vmatprep.subr.mxu0 0.0
        %1463 = vmatpush1.msra.mxu0 0.0
        %1464 = vmatprep.subr.mxu0 0.0
        %1465 = vmatpush1.msra.mxu0 0.0
        %1466 = vmatprep.subr.mxu0 0.0
        %1467 = vmatpush1.msra.mxu0 0.0
        %1468 = vmatprep.subr.mxu0 0.0
        %1469 = vmatpush1.msra.mxu0 0.0
        %1470 = vmatprep.subr.mxu0 0.0
        %1471 = vmatpush1.msra.mxu0 %v1435
        %1472 = vmatprep.subr.mxu0 0.0
        %1473 = vmatpush1.msra.mxu0 %v1434
        %1474 = vmatprep.subr.mxu0 0.0
        %1475 = vmatpush1.msra.mxu0 %v1433
        %1476 = vmatprep.subr.mxu0 0.0
        %1477 = vmatpush1.msra.mxu0 %v1432
        %1478 = vmatprep.subr.mxu0 0.0
        %1479 = vmatpush2.msra.mxu0 0.0
        %1480 = vmatprep.subr.mxu0 0.0
        %1481 = vmatpush2.msra.mxu0 0.0
        %1482 = vmatprep.subr.mxu0 0.0
        %1483 = vmatpush2.msra.mxu0 0.0
        %1484 = vmatprep.subr.mxu0 0.0
        %1485 = vmatpush2.msra.mxu0 0.0
        %1486 = vmatprep.subr.mxu0 0.0
        %1487 = vmatpush2.msra.mxu0 0.0
        %1488 = vmatprep.subr.mxu0 0.0
        %1489 = vmatpush2.msra.mxu0 0.0
        %1490 = vmatprep.subr.mxu0 0.0
        %1491 = vmatpush2.msra.mxu0 0.0
        %1492 = vmatprep.subr.mxu0 0.0
        %1493 = vmatpush2.msra.mxu0 0.0
        %1494 = vmatprep.subr.mxu0 0.0
        %1495 = vmatpush2.msra.mxu0 0.0
        %1496 = vmatprep.subr.mxu0 0.0
        %1497 = vmatpush2.msra.mxu0 0.0
        %1498 = vmatprep.subr.mxu0 0.0
        %1499 = vmatpush2.msra.mxu0 0.0
        %1500 = vmatprep.subr.mxu0 0.0
        %1501 = vmatpush2.msra.mxu0 0.0
        %1502 = vmatprep.subr.mxu0 0.0
        %1503 = vmatpush2.msra.mxu0 0.0
        %1504 = vmatprep.subr.mxu0 0.0
        %1505 = vmatpush2.msra.mxu0 0.0
        %1506 = vmatprep.subr.mxu0 0.0
        %1507 = vmatpush2.msra.mxu0 0.0
        %1508 = vmatprep.subr.mxu0 0.0
        %1509 = vmatpush2.msra.mxu0 0.0
        %1510 = vmatprep.mubr.f32.mxu0 0.0
        %1511 = vmatmul.mubr.f32.gmra.mxu0 %v1444
        %v1512 = vpop.f32.mrf.mxu0
        %v1513 = vadd.f32 %v1441, %v1512
        %v1514 = vpop.f32.mrf.mxu0
        %1515 = vdwg.mxu0
        %v1516 = vadd.f32 %v646, %v1513
        %v1517 = vld [vmem:[%s619] sm:$0x1]
        %v1518 = vld [vmem:[%s622] sm:$0x1]
        %v1519 = vsel %vm649, %v1516, 0.0
        %1520 = vadd.xlane.f32.xlu0 %v1519
        %v1521 = vpop.xlane.xlu0 %1520
        %v1522 = vmul.f32 %v1521, %v653
        %v1523 = vsub.f32 %v1516, %v1522
        %v1524 = vmul.f32 %v1523, %v1523
        %v1525 = vsel %vm649, %v1524, 0.0
        %1526 = vadd.xlane.f32.xlu0 %v1525
        %v1527 = vpop.xlane.xlu0 %1526
        %v1528 = vmul.f32 %v1527, %v653
        %v1529 = vadd.f32 %v1528, 1e-05
        %v1530 = vrsqrt.pop %v1529
        %v1531 = vmul.f32 %v1523, %v1530
        %v1533 = vlaneseq
        %v1534 = vshrl.u32 %v1533, 7
        %v1535 = vsub.s32 0, %v1534
        %v1536 = vrot.slane %v1517, %v1535
        %v1538 = vmul.f32 %v1531, %v1536
        %v1540 = vlaneseq
        %v1541 = vshrl.u32 %v1540, 7
        %v1542 = vsub.s32 0, %v1541
        %v1543 = vrot.slane %v1518, %v1542
        %v1545 = vadd.f32 %v1538, %v1543
        %v1546 = vld [vmem:[%s627] sm:$0xff]
        %v1547 = vld [vmem:[%s627 + $0x8] sm:$0xff]
        %v1548 = vld [vmem:[%s627 + $0x10] sm:$0xff]
        %v1549 = vld [vmem:[%s627 + $0x18] sm:$0xff]
        %v1550 = vld [vmem:[%s630] sm:$0x1]
        %v1552 = vlaneseq
        %v1553 = vshrl.u32 %v1552, 7
        %v1554 = vsub.s32 0, %v1553
        %v1555 = vrot.slane %v1550, %v1554
        %v1558 = vsel %vm649, %v1545, 0
        %1560 = vmatprep.subr.mxu0 0.0
        %1561 = vmatpush1.msra.mxu0 0.0
        %1562 = vmatprep.subr.mxu0 0.0
        %1563 = vmatpush1.msra.mxu0 0.0
        %1564 = vmatprep.subr.mxu0 0.0
        %1565 = vmatpush1.msra.mxu0 0.0
        %1566 = vmatprep.subr.mxu0 0.0
        %1567 = vmatpush1.msra.mxu0 0.0
        %1568 = vmatprep.subr.mxu0 0.0
        %1569 = vmatpush1.msra.mxu0 0.0
        %1570 = vmatprep.subr.mxu0 0.0
        %1571 = vmatpush1.msra.mxu0 0.0
        %1572 = vmatprep.subr.mxu0 0.0
        %1573 = vmatpush1.msra.mxu0 0.0
        %1574 = vmatprep.subr.mxu0 0.0
        %1575 = vmatpush1.msra.mxu0 0.0
        %1576 = vmatprep.subr.mxu0 0.0
        %1577 = vmatpush1.msra.mxu0 0.0
        %1578 = vmatprep.subr.mxu0 0.0
        %1579 = vmatpush1.msra.mxu0 0.0
        %1580 = vmatprep.subr.mxu0 0.0
        %1581 = vmatpush1.msra.mxu0 0.0
        %1582 = vmatprep.subr.mxu0 0.0
        %1583 = vmatpush1.msra.mxu0 0.0
        %1584 = vmatprep.subr.mxu0 0.0
        %1585 = vmatpush1.msra.mxu0 %v1549
        %1586 = vmatprep.subr.mxu0 0.0
        %1587 = vmatpush1.msra.mxu0 %v1548
        %1588 = vmatprep.subr.mxu0 0.0
        %1589 = vmatpush1.msra.mxu0 %v1547
        %1590 = vmatprep.subr.mxu0 0.0
        %1591 = vmatpush1.msra.mxu0 %v1546
        %1592 = vmatprep.subr.mxu0 0.0
        %1593 = vmatpush2.msra.mxu0 0.0
        %1594 = vmatprep.subr.mxu0 0.0
        %1595 = vmatpush2.msra.mxu0 0.0
        %1596 = vmatprep.subr.mxu0 0.0
        %1597 = vmatpush2.msra.mxu0 0.0
        %1598 = vmatprep.subr.mxu0 0.0
        %1599 = vmatpush2.msra.mxu0 0.0
        %1600 = vmatprep.subr.mxu0 0.0
        %1601 = vmatpush2.msra.mxu0 0.0
        %1602 = vmatprep.subr.mxu0 0.0
        %1603 = vmatpush2.msra.mxu0 0.0
        %1604 = vmatprep.subr.mxu0 0.0
        %1605 = vmatpush2.msra.mxu0 0.0
        %1606 = vmatprep.subr.mxu0 0.0
        %1607 = vmatpush2.msra.mxu0 0.0
        %1608 = vmatprep.subr.mxu0 0.0
        %1609 = vmatpush2.msra.mxu0 0.0
        %1610 = vmatprep.subr.mxu0 0.0
        %1611 = vmatpush2.msra.mxu0 0.0
        %1612 = vmatprep.subr.mxu0 0.0
        %1613 = vmatpush2.msra.mxu0 0.0
        %1614 = vmatprep.subr.mxu0 0.0
        %1615 = vmatpush2.msra.mxu0 0.0
        %1616 = vmatprep.subr.mxu0 0.0
        %1617 = vmatpush2.msra.mxu0 0.0
        %1618 = vmatprep.subr.mxu0 0.0
        %1619 = vmatpush2.msra.mxu0 0.0
        %1620 = vmatprep.subr.mxu0 0.0
        %1621 = vmatpush2.msra.mxu0 0.0
        %1622 = vmatprep.subr.mxu0 0.0
        %1623 = vmatpush2.msra.mxu0 0.0
        %1624 = vmatprep.mubr.f32.mxu0 0.0
        %1625 = vmatmul.mubr.f32.gmra.mxu0 %v1558
        %v1626 = vpop.f32.mrf.mxu0
        %v1627 = vadd.f32 %v1555, %v1626
        %v1628 = vpop.f32.mrf.mxu0
        %1629 = vdwg.mxu0
        %v1630 = vmax.f32 %v1627, 0.0
        %v1631 = vld [vmem:[%s635] sm:$0xff]
        %v1632 = vld [vmem:[%s635 + $0x8] sm:$0xff]
        %v1633 = vld [vmem:[%s635 + $0x10] sm:$0xff]
        %v1634 = vld [vmem:[%s635 + $0x18] sm:$0xff]
        %v1635 = vld [vmem:[%s635 + $0x20] sm:$0xff]
        %v1636 = vld [vmem:[%s635 + $0x28] sm:$0xff]
        %v1637 = vld [vmem:[%s635 + $0x30] sm:$0xff]
        %v1638 = vld [vmem:[%s635 + $0x38] sm:$0xff]
        %v1639 = vld [vmem:[%s638] sm:$0x1]
        %v1641 = vlaneseq
        %v1642 = vshrl.u32 %v1641, 7
        %v1643 = vsub.s32 0, %v1642
        %v1644 = vrot.slane %v1639, %v1643
        %vm1646 = vcmask 523264
        %v1648 = vsel %vm1646, %v1630, 0
        %1650 = vmatprep.subr.mxu0 0.0
        %1651 = vmatpush1.msra.mxu0 0.0
        %1652 = vmatprep.subr.mxu0 0.0
        %1653 = vmatpush1.msra.mxu0 0.0
        %1654 = vmatprep.subr.mxu0 0.0
        %1655 = vmatpush1.msra.mxu0 0.0
        %1656 = vmatprep.subr.mxu0 0.0
        %1657 = vmatpush1.msra.mxu0 0.0
        %1658 = vmatprep.subr.mxu0 0.0
        %1659 = vmatpush1.msra.mxu0 0.0
        %1660 = vmatprep.subr.mxu0 0.0
        %1661 = vmatpush1.msra.mxu0 0.0
        %1662 = vmatprep.subr.mxu0 0.0
        %1663 = vmatpush1.msra.mxu0 0.0
        %1664 = vmatprep.subr.mxu0 0.0
        %1665 = vmatpush1.msra.mxu0 0.0
        %1666 = vmatprep.subr.mxu0 0.0
        %1667 = vmatpush1.msra.mxu0 %v1638
        %1668 = vmatprep.subr.mxu0 0.0
        %1669 = vmatpush1.msra.mxu0 %v1637
        %1670 = vmatprep.subr.mxu0 0.0
        %1671 = vmatpush1.msra.mxu0 %v1636
        %1672 = vmatprep.subr.mxu0 0.0
        %1673 = vmatpush1.msra.mxu0 %v1635
        %1674 = vmatprep.subr.mxu0 0.0
        %1675 = vmatpush1.msra.mxu0 %v1634
        %1676 = vmatprep.subr.mxu0 0.0
        %1677 = vmatpush1.msra.mxu0 %v1633
        %1678 = vmatprep.subr.mxu0 0.0
        %1679 = vmatpush1.msra.mxu0 %v1632
        %1680 = vmatprep.subr.mxu0 0.0
        %1681 = vmatpush1.msra.mxu0 %v1631
        %1682 = vmatprep.subr.mxu0 0.0
        %1683 = vmatpush2.msra.mxu0 0.0
        %1684 = vmatprep.subr.mxu0 0.0
        %1685 = vmatpush2.msra.mxu0 0.0
        %1686 = vmatprep.subr.mxu0 0.0
        %1687 = vmatpush2.msra.mxu0 0.0
        %1688 = vmatprep.subr.mxu0 0.0
        %1689 = vmatpush2.msra.mxu0 0.0
        %1690 = vmatprep.subr.mxu0 0.0
        %1691 = vmatpush2.msra.mxu0 0.0
        %1692 = vmatprep.subr.mxu0 0.0
        %1693 = vmatpush2.msra.mxu0 0.0
        %1694 = vmatprep.subr.mxu0 0.0
        %1695 = vmatpush2.msra.mxu0 0.0
        %1696 = vmatprep.subr.mxu0 0.0
        %1697 = vmatpush2.msra.mxu0 0.0
        %1698 = vmatprep.subr.mxu0 0.0
        %1699 = vmatpush2.msra.mxu0 0.0
        %1700 = vmatprep.subr.mxu0 0.0
        %1701 = vmatpush2.msra.mxu0 0.0
        %1702 = vmatprep.subr.mxu0 0.0
        %1703 = vmatpush2.msra.mxu0 0.0
        %1704 = vmatprep.subr.mxu0 0.0
        %1705 = vmatpush2.msra.mxu0 0.0
        %1706 = vmatprep.subr.mxu0 0.0
        %1707 = vmatpush2.msra.mxu0 0.0
        %1708 = vmatprep.subr.mxu0 0.0
        %1709 = vmatpush2.msra.mxu0 0.0
        %1710 = vmatprep.subr.mxu0 0.0
        %1711 = vmatpush2.msra.mxu0 0.0
        %1712 = vmatprep.subr.mxu0 0.0
        %1713 = vmatpush2.msra.mxu0 0.0
        %1714 = vmatprep.mubr.f32.mxu0 0.0
        %1715 = vmatmul.mubr.f32.gmra.mxu0 %v1648
        %v1716 = vpop.f32.mrf.mxu0
        %v1717 = vadd.f32 %v1644, %v1716
        %v1718 = vpop.f32.mrf.mxu0
        %1719 = vdwg.mxu0
        %v1720 = vadd.f32 %v1516, %v1717
        %1721 = vst.msk [vmem:[#allocation2] sm:$0xff] %vm649, %v1720
        %p1722 = scmp.eq.s32.totalorder %s37, 1
        // Predicated region
        $region81: #{tpu_custom_call.1} parent=67 // pred_check
          %p1723 = pneg %p1722
        $region82: #{tpu_custom_call.1} parent=67 // pred_check_branch
          %1725 = sbr.rel (%p1723) target = $region84
        $region83: #{tpu_custom_call.1} parent=67 // pred_region
          %1726 = vst.msk [vmem:[%s600] sm:$0xff] %vm649, %v1720
        $region84: #{tpu_custom_call.1} parent=67 // pred_fallthru
          _
        %s1727 = sand.u32 %s364, 1
        %s1728 = scalar_lea.sflag [#allocation5], %s1727
        %s1729 = sand.u32 %s364, 1
        %s1730 = smul.addr %s1729, 8
        %s1731 = scalar_lea.vmem [#allocation8], %s1730
        // Predicated region
        $region85: #{tpu_custom_call.1} parent=67 // pred_check
          %p1732 = pneg %p374
        $region86: #{tpu_custom_call.1} parent=67 // pred_check_branch
          %1734 = sbr.rel (%p1732) target = $region88
        $region87: #{tpu_custom_call.1} parent=67 // pred_region
          %s1736 = ssub.s32 128, 128
          %1737 = vsyncadd %s1728, %s1736
          %s1738 = smul.addr %s36, 128
          %s1739 = scalar_lea.hbm %s12, %s1738
          %s1741 = sshll.u32 %s1731, 4
          %s1742 = int_to_ptr.vmem [resolvable:$true] %s1741
          %1744 = dma.vmem_to_hbm [thread:$0]  %s1742, 128, %s1739, %s1728
        $region88: #{tpu_custom_call.1} parent=67 // pred_fallthru
          _
      $region68: #{tpu_custom_call.1} parent=5 // pred_fallthru
        _
      %p1745 = scmp.le.s32.totalorder 2, %s27
      // Predicated region
      $region89: #{tpu_custom_call.1} parent=5 // pred_check
        %p1746 = pneg %p1745
      $region90: #{tpu_custom_call.1} parent=5 // pred_check_branch
        %1748 = sbr.rel (%p1746) target = $region92
      $region91: #{tpu_custom_call.1} parent=5 // pred_region
        %s1749 = ssub.s32 %s27, 2
        // Predicated region
        $region93: #{tpu_custom_call.1} parent=91 // pred_check
          %p1750 = pneg %p380
        $region94: #{tpu_custom_call.1} parent=91 // pred_check_branch
          %1752 = sbr.rel (%p1750) target = $region96
        $region95: #{tpu_custom_call.1} parent=91 // pred_region
          %s1753 = sand.u32 %s365, 1
          %s1754 = scalar_lea.sflag [#allocation5], %s1753
          %s1755 = sand.u32 %s365, 1
          %s1756 = smul.addr %s1755, 8
          %s1757 = scalar_lea.vmem [#allocation8], %s1756
          %1758 = dma.done %s1754, 128
        $region96: #{tpu_custom_call.1} parent=91 // pred_fallthru
          _
      $region92: #{tpu_custom_call.1} parent=5 // pred_fallthru
        _
    $region6: #{tpu_custom_call.1} parent=1 // loop_footer
      %s31 = sadd.s32 1, %s27
    $region7: #{tpu_custom_call.1} parent=1 // loop_footer_branch
      %26 = sbr.rel target = $region3
    $region8: #{tpu_custom_call.1} parent=1 // loop_exit
      _
    %1759 = vsyncpa [#allocation4], 1
    %s1760 = scalar_lea.sflag [#allocation4], 1
    %1761 = vsyncpa %s1760, 1
    %1762 = vsyncpa [#allocation7], 1
    %s1763 = scalar_lea.sflag [#allocation7], 1
    %1764 = vsyncpa %s1763, 1
    %1765 = vsyncpa [#allocation5], 1
    %s1766 = scalar_lea.sflag [#allocation5], 1
    %1767 = vsyncpa %s1766, 1

</llo_original>
